<compile_context>
chip_gen: v7x
topology: tpu7x:2x2x1
jax: 0.10.0
libtpu: 0.0.40
codegen_flags: <defaults>
</compile_context>

<pallas_src>
import jax
import jax.numpy as jnp
import numpy as np
from jax.experimental import pallas as pl
from jax.experimental.pallas import tpu as pltpu


def _cdiv(a, b):
    return -(-a // b)


def _round_up(x, m):
    return _cdiv(x, m) * m


def make_fp_kernel(fp_nn: int, num_layers: int, P2: int):
    """Builds the Pallas kernel body for fixed fp_nn / #MLP layers / P2."""

    def kernel(xyz1_ref, xyz2t_ref, rb_ref, pts1_ref, pts2_ref,
               w1a_ref, w1b_ref, b1_ref, *rest):
        # rest = [wt2, b2, (wt3, b3)] refs followed by the output ref.
        out_ref = rest[-1]
        tail = rest[:-1]

        xyz1 = xyz1_ref[0].astype(jnp.float32)     # [TP1, 3]
        xyz2t = xyz2t_ref[0].astype(jnp.float32)   # [3, P2]  (lane-dense)
        r_b = rb_ref[0].astype(jnp.float32)        # [1, P2]  (||xyz2||^2)
        pts1 = pts1_ref[0].astype(jnp.float32)     # [TP1, C1]
        pts2 = pts2_ref[0].astype(jnp.float32)     # [P2, C2]

        TP1 = xyz1.shape[0]
        C2 = pts2.shape[1]

        # --- squared distance on the MXU, same formula as the reference:
        #     D = ||a||^2 - 2 a.b + ||b||^2.  The MXU is otherwise nearly idle
        #     here, so the K=3 matmul is effectively free filler.
        r_a = jnp.sum(xyz1 * xyz1, axis=1, keepdims=True)                 # [TP1,1]
        m = jnp.dot(xyz1, xyz2t, preferred_element_type=jnp.float32)      # [TP1,P2]
        cur = 2.0 * m - r_a - r_b                                         # == -D

        # torch.topk(-D, k): k passes, each selecting the first (lowest-index)
        # maximum per row.
        lane_iota = jax.lax.broadcasted_iota(jnp.int32, (1, P2), 1)       # [1,P2]
        neg_inf = jnp.float32(-jnp.inf)

        acc_max = jnp.full((TP1, C2), -jnp.inf, dtype=jnp.float32)
        sum_inv = jnp.zeros((TP1, 1), dtype=jnp.float32)

        # TODO(synk): if fp_nn > P2 later iterations select from an all -inf
        # row (torch.topk would error); callers must keep fp_nn <= P2.
        for _ in range(fp_nn):
            v = jnp.max(cur, axis=1, keepdims=True)                       # [TP1,1]
            # TODO(synk): jnp.argmax would drop two [TP1,P2] passes per k but
            # its Mosaic lowering is not guaranteed on all jax versions; keep
            # the explicit first-index tie-break (same result as torch.topk).
            first_idx = jnp.min(
                jnp.where(cur == v, lane_iota, P2), axis=1, keepdims=True)
            is_sel = lane_iota == first_idx                               # bool

            # fp_disc = clamp(topk(-D), 1e-10, 10000)  (faithful to reference)
            disc = jnp.clip(v, 1e-10, 10000.0)
            inv = pl.reciprocal(disc)                                     # [TP1,1]

            # Fold 1/disc into the selection mask: the one-hot gather matmul
            # then directly produces feat * inv (no cast / extra multiply).
            sel_w = jnp.where(is_sel, inv, 0.0)                           # [TP1,P2]
            featinv = jnp.dot(sel_w, pts2, preferred_element_type=jnp.float32)

            # max over neighbors of feat/disc; the common positive normalizer
            # sum(1/disc) is pulled out of the max.
            acc_max = jnp.maximum(acc_max, featinv)
            sum_inv = sum_inv + inv

            # remove this neighbor before the next selection pass
            cur = jnp.where(is_sel, neg_inf, cur)

        # reciprocal ([TP1,1]) + broadcast multiply instead of a division.
        fp_group = acc_max * pl.reciprocal(sum_inv)                       # [TP1,C2]

        # --- MLP (conv1d k=1 + folded BN + ReLU), channels-last matmuls.
        # First layer split into two matmuls: no lane-axis concat needed.
        x = jnp.dot(fp_group, w1a_ref[...], preferred_element_type=jnp.float32)
        x = x + jnp.dot(pts1, w1b_ref[...], preferred_element_type=jnp.float32)
        x = jnp.maximum(x + b1_ref[...], 0.0)

        for l in range(num_layers - 1):
            wt = tail[2 * l][...]            # [Cin, Cout] (pre-transposed)
            b = tail[2 * l + 1][...]         # [1, Cout]
            x = jnp.maximum(
                jnp.dot(x, wt, preferred_element_type=jnp.float32) + b, 0.0)

        out_ref[0] = x.astype(out_ref.dtype)

    return kernel


def _tpu_vmem_capacity_bytes() -> int:
    """Physical VMEM per core; falls back to the tightest (v7x) if unknown."""
    try:
        return int(pltpu.get_tpu_info().vmem_capacity_bytes)
    except Exception:
        return 64 * 1024 * 1024


def _choose_tile_p1(P1: int, P2: int, B: int, vmem_limit: int) -> int:
    """Generation-aware P1 tile size.

    Bounds the live [TILE_P1, P2] f32 intermediates of the k-selection loop
    (~6 copies) to roughly a third of the VMEM limit, allows larger tiles on
    128-MiB parts (v5e/v6e), and makes sure the parallel grid exposes at
    least two steps for dual-TensorCore (v7x) parts when possible.
    """
    live_copies = 6
    cap_from_p2 = (vmem_limit // 3) // max(1, live_copies * P2 * 4)
    max_tile = 512 if vmem_limit >= (96 << 20) else 256
    tile = min(max_tile, max(8, cap_from_p2), _round_up(P1, 8))
    tile = max(8, (tile // 8) * 8)
    if B * _cdiv(P1, tile) < 2 and P1 > 8:
        tile = max(8, _round_up(_cdiv(P1, 2), 8))
    return tile


def _pad_dim(a, axis, target):
    pad = target - a.shape[axis]
    if pad <= 0:
        return a
    widths = [(0, 0)] * a.ndim
    widths[axis] = (0, pad)
    return jnp.pad(a, widths)


def fp_module_forward(xyz1, xyz2, pts1, pts2, folded_params, fp_nn=3,
                      tile_p1=None):
    """Pallas implementation of FP_module.forward.

    xyz1: [B, P1, 3], xyz2: [B, P2, 3], pts1: [B, P1, C1], pts2: [B, P2, C2]
    folded_params: list of (W[Cout, Cin], b[Cout]) with BN folded in.
    Returns [B, P1, mlp[-1]] float32.
    """
    B, P1, _ = xyz1.shape
    _, P2, _ = xyz2.shape
    C1 = pts1.shape[2]
    C2 = pts2.shape[2]
    num_layers = len(folded_params)
    out_dim = folded_params[-1][0].shape[0]

    # Generation-aware VMEM budget: ~75% of physical VMEM, capped at 100 MiB
    # (-> 96 MiB on 128-MiB v5e/v6e, 48 MiB on 64-MiB v7x).
    vmem_cap = _tpu_vmem_capacity_bytes()
    vmem_limit = int(min(max((vmem_cap * 3) // 4, 16 << 20), 100 << 20))

    if tile_p1 is None:
        tile_p1 = _choose_tile_p1(P1, P2, B, vmem_limit)
    assert tile_p1 % 8 == 0, tile_p1
    P1_pad = _round_up(P1, tile_p1)
    n_tiles = P1_pad // tile_p1

    # Lane-dense output: pad the output channel dim up to a multiple of 128 so
    # stores are full-lane vst; sliced back to out_dim below.
    out_pad = _round_up(out_dim, 128)

    kernel = make_fp_kernel(fp_nn, num_layers, P2)

    # Host-side weight prep: pre-transpose to [Cin, Cout]; split layer-1 so
    # the kernel never concatenates [fp_group, pts1] along the lane axis.
    w1, b1 = folded_params[0]
    w1 = jnp.asarray(w1)
    b1 = jnp.asarray(b1)
    if num_layers == 1 and out_pad != out_dim:
        w1 = _pad_dim(w1, 0, out_pad)
        b1 = _pad_dim(b1, 0, out_pad)
    w1a = w1[:, :C2].T                         # [C2, mlp1]
    w1b = w1[:, C2:].T                         # [C1, mlp1]
    b1r = b1.reshape(1, -1)                    # [1, mlp1]

    wb_args = [w1a, w1b, b1r]
    wb_specs = [
        pl.BlockSpec(w1a.shape, lambda b, t: (0, 0)),
        pl.BlockSpec(w1b.shape, lambda b, t: (0, 0)),
        pl.BlockSpec(b1r.shape, lambda b, t: (0, 0)),
    ]
    for li, (w, b) in enumerate(folded_params[1:]):
        w = jnp.asarray(w)
        b = jnp.asarray(b)
        if li == num_layers - 2 and out_pad != out_dim:    # last MLP layer
            w = _pad_dim(w, 0, out_pad)
            b = _pad_dim(b, 0, out_pad)
        wt = w.T                               # [Cin, Cout]
        br = b.reshape(1, -1)                  # [1, Cout]
        wb_args += [wt, br]
        wb_specs += [
            pl.BlockSpec(wt.shape, lambda b_, t_: (0, 0)),
            pl.BlockSpec(br.shape, lambda b_, t_: (0, 0)),
        ]

    # Lane-dense xyz2 layout [B, 3, P2] and per-batch ||xyz2||^2 ([B, 1, P2]).
    xyz2t = jnp.transpose(xyz2, (0, 2, 1))
    r_b2 = jnp.sum(xyz2 * xyz2, axis=2)[:, None, :]

    # Pad P1 up to a tile multiple (replaces the old single-tile fallback that
    # could blow VMEM on v7x when P1 had no small divisor).
    xyz1_p = _pad_dim(xyz1, 1, P1_pad)
    pts1_p = _pad_dim(pts1, 1, P1_pad)

    # xyz2t / r_b2 / pts2 depend only on the batch index -> resident across
    # all P1 tiles of a batch element.  On small-VMEM parts with large P2 keep
    # them single-buffered (they only change at batch boundaries).
    resident_kwargs = {}
    if (vmem_cap <= (64 << 20) and n_tiles > 1
            and P2 * (3 + C2) * 4 > (2 << 20)):
        resident_kwargs = dict(pipeline_mode=pl.Buffered(1))
    xyz2t_spec = pl.BlockSpec((1, 3, P2), lambda b, t: (b, 0, 0),
                              **resident_kwargs)
    rb_spec = pl.BlockSpec((1, 1, P2), lambda b, t: (b, 0, 0),
                           **resident_kwargs)
    pts2_spec = pl.BlockSpec((1, P2, C2), lambda b, t: (b, 0, 0),
                             **resident_kwargs)

    grid_spec = pltpu.PrefetchScalarGridSpec(
        num_scalar_prefetch=0,
        grid=(B, n_tiles),
        in_specs=[
            pl.BlockSpec((1, tile_p1, 3), lambda b, t: (b, t, 0)),
            xyz2t_spec,
            rb_spec,
            pl.BlockSpec((1, tile_p1, C1), lambda b, t: (b, t, 0)),
            pts2_spec,
        ] + wb_specs,
        out_specs=pl.BlockSpec((1, tile_p1, out_pad), lambda b, t: (b, t, 0)),
    )

    out = pl.pallas_call(
        kernel,
        out_shape=jax.ShapeDtypeStruct((B, P1_pad, out_pad), jnp.float32),
        grid_spec=grid_spec,
        compiler_params=pltpu.CompilerParams(
            dimension_semantics=("parallel", "parallel"),
            vmem_limit_bytes=vmem_limit),
    )(xyz1_p, xyz2t, r_b2, pts1_p, pts2, *wb_args)

    return out[:, :P1, :out_dim]


def fp_module_reference(xyz1, xyz2, pts1, pts2, folded_params, fp_nn=3):
    """Pure-JAX reference mirroring the PyTorch forward (for verification)."""
    r_a = jnp.sum(xyz1 * xyz1, axis=2, keepdims=True)
    r_b = jnp.sum(xyz2 * xyz2, axis=2, keepdims=True)
    m = jnp.einsum("bij,bkj->bik", xyz1, xyz2)
    dist = r_a - 2.0 * m + jnp.transpose(r_b, (0, 2, 1))
    vals, idx = jax.lax.top_k(-dist, fp_nn)                 # [B, P1, k]
    disc = jnp.clip(vals, 1e-10, 10000.0)
    inv = 1.0 / disc
    weight = inv / jnp.sum(inv, axis=2, keepdims=True)      # [B, P1, k]
    feat = jax.vmap(lambda p2, i: p2[i])(pts2, idx)         # [B, P1, k, C2]
    group = jnp.max(feat * weight[..., None], axis=2)       # [B, P1, C2]
    x = jnp.concatenate([group, pts1], axis=2)
    for w, b in folded_params:
        x = jnp.maximum(jnp.einsum("bpc,oc->bpo", x, w) + b, 0.0)
    return x


def fold_conv_bn(w, b, gamma, beta, mean, var, eps=1e-5):
    """Fold Conv1d(k=1) + BatchNorm1d (inference mode) into a single affine."""
    # TODO(synk): training-mode BatchNorm (batch statistics) is not reproduced;
    # inference-mode running stats are folded into the conv weights instead.
    scale = gamma / jnp.sqrt(var + eps)
    return w * scale[:, None], (b - mean) * scale + beta


if __name__ == "__main__":
    key = jax.random.PRNGKey(0)
    keys = jax.random.split(key, 24)

    B, P1, P2 = 2, 40, 8
    C1, C2 = 6, 8
    fp_nn = 3
    mlp_list = [32, 32, 16]
    input_dim = C2 + C1                      # conv1 input channels

    xyz1 = jax.random.normal(keys[0], (B, P1, 3), jnp.float32)
    xyz2 = jax.random.normal(keys[1], (B, P2, 3), jnp.float32)
    pts1 = jax.random.normal(keys[2], (B, P1, C1), jnp.float32)
    pts2 = jax.random.normal(keys[3], (B, P2, C2), jnp.float32)

    dims = [input_dim] + mlp_list
    folded_params = []
    ki = 4
    for l in range(len(mlp_list)):
        cin, cout = dims[l], dims[l + 1]
        w = 0.1 * jax.random.normal(keys[ki], (cout, cin), jnp.float32); ki += 1
        b = 0.1 * jax.random.normal(keys[ki], (cout,), jnp.float32); ki += 1
        gamma = 1.0 + 0.1 * jax.random.normal(keys[ki], (cout,), jnp.float32); ki += 1
        beta = 0.1 * jax.random.normal(keys[ki], (cout,), jnp.float32); ki += 1
        mean = 0.1 * jax.random.normal(keys[ki], (cout,), jnp.float32); ki += 1
        var = 1.0 + 0.1 * jnp.abs(jax.random.normal(keys[ki], (cout,), jnp.float32)); ki += 1
        folded_params.append(fold_conv_bn(w, b, gamma, beta, mean, var))

    # tile_p1=16 exercises multi-tile, P1 padding (40 -> 48) and lane-dense
    # output padding (16 -> 128) even at small shapes.
    out = fp_module_forward(xyz1, xyz2, pts1, pts2, folded_params,
                            fp_nn=fp_nn, tile_p1=16)
    out = jax.block_until_ready(out)

    ref = fp_module_reference(xyz1, xyz2, pts1, pts2, folded_params, fp_nn=fp_nn)
    ref = jax.block_until_ready(ref)

    assert out.shape == (B, P1, mlp_list[-1]), out.shape
    np.testing.assert_allclose(np.asarray(out), np.asarray(ref),
                               rtol=1e-4, atol=1e-4)
    print("KERNEL_OK")
</pallas_src>

<mosaic_0001>
module attributes {stable_mosaic.version = 11 : i64} {
  func.func @kernel(%arg0: i32, %arg1: i32, %arg2: memref<1x16x3xf32, #tpu.memory_space<vmem>>, %arg3: memref<1x3x8xf32, #tpu.memory_space<vmem>>, %arg4: memref<1x1x8xf32, #tpu.memory_space<vmem>>, %arg5: memref<1x16x6xf32, #tpu.memory_space<vmem>>, %arg6: memref<1x8x8xf32, #tpu.memory_space<vmem>>, %arg7: memref<8x32xf32, #tpu.memory_space<vmem>>, %arg8: memref<6x32xf32, #tpu.memory_space<vmem>>, %arg9: memref<1x32xf32, #tpu.memory_space<vmem>>, %arg10: memref<32x32xf32, #tpu.memory_space<vmem>>, %arg11: memref<1x32xf32, #tpu.memory_space<vmem>>, %arg12: memref<32x128xf32, #tpu.memory_space<vmem>>, %arg13: memref<1x128xf32, #tpu.memory_space<vmem>>, %arg14: memref<1x16x128xf32, #tpu.memory_space<vmem>>) attributes {dimension_semantics = [#tpu.dimension_semantics<parallel>, #tpu.dimension_semantics<parallel>], iteration_bounds = array<i64: 2, 3>, scalar_prefetch = 0 : i64, scratch_operands = 0 : i64, tpu.core_type = #tpu.core_type<tc>, window_params = [{transform_indices = @transform_0, window_bounds = array<i64: 1, 16, 3>}, {transform_indices = @transform_1, window_bounds = array<i64: 1, 3, 8>}, {transform_indices = @transform_2, window_bounds = array<i64: 1, 1, 8>}, {transform_indices = @transform_3, window_bounds = array<i64: 1, 16, 6>}, {transform_indices = @transform_4, window_bounds = array<i64: 1, 8, 8>}, {pipeline_mode = #tpu.pipeline_mode<synchronous>, transform_indices = @transform_5, window_bounds = array<i64: 8, 32>}, {pipeline_mode = #tpu.pipeline_mode<synchronous>, transform_indices = @transform_6, window_bounds = array<i64: 6, 32>}, {pipeline_mode = #tpu.pipeline_mode<synchronous>, transform_indices = @transform_7, window_bounds = array<i64: 1, 32>}, {pipeline_mode = #tpu.pipeline_mode<synchronous>, transform_indices = @transform_8, window_bounds = array<i64: 32, 32>}, {pipeline_mode = #tpu.pipeline_mode<synchronous>, transform_indices = @transform_9, window_bounds = array<i64: 1, 32>}, {pipeline_mode = #tpu.pipeline_mode<synchronous>, transform_indices = @transform_10, window_bounds = array<i64: 32, 128>}, {pipeline_mode = #tpu.pipeline_mode<synchronous>, transform_indices = @transform_11, window_bounds = array<i64: 1, 128>}, {transform_indices = @transform_12, window_bounds = array<i64: 1, 16, 128>}]} {
    %c0 = arith.constant 0 : index
    %c0_0 = arith.constant 0 : index
    %c0_1 = arith.constant 0 : index
    %0 = vector.load %arg2[%c0, %c0_0, %c0_1] : memref<1x16x3xf32, #tpu.memory_space<vmem>>, vector<1x16x3xf32>
    %1 = vector.shape_cast %0 : vector<1x16x3xf32> to vector<16x3xf32>
    %c0_2 = arith.constant 0 : index
    %c0_3 = arith.constant 0 : index
    %c0_4 = arith.constant 0 : index
    %2 = vector.load %arg3[%c0_2, %c0_3, %c0_4] : memref<1x3x8xf32, #tpu.memory_space<vmem>>, vector<1x3x8xf32>
    %3 = vector.shape_cast %2 : vector<1x3x8xf32> to vector<3x8xf32>
    %c0_5 = arith.constant 0 : index
    %c0_6 = arith.constant 0 : index
    %c0_7 = arith.constant 0 : index
    %4 = vector.load %arg4[%c0_5, %c0_6, %c0_7] : memref<1x1x8xf32, #tpu.memory_space<vmem>>, vector<1x1x8xf32>
    %5 = vector.shape_cast %4 : vector<1x1x8xf32> to vector<1x8xf32>
    %c0_8 = arith.constant 0 : index
    %c0_9 = arith.constant 0 : index
    %c0_10 = arith.constant 0 : index
    %6 = vector.load %arg5[%c0_8, %c0_9, %c0_10] : memref<1x16x6xf32, #tpu.memory_space<vmem>>, vector<1x16x6xf32>
    %7 = vector.shape_cast %6 : vector<1x16x6xf32> to vector<16x6xf32>
    %c0_11 = arith.constant 0 : index
    %c0_12 = arith.constant 0 : index
    %c0_13 = arith.constant 0 : index
    %8 = vector.load %arg6[%c0_11, %c0_12, %c0_13] : memref<1x8x8xf32, #tpu.memory_space<vmem>>, vector<1x8x8xf32>
    %9 = vector.shape_cast %8 : vector<1x8x8xf32> to vector<8x8xf32>
    %10 = arith.mulf %1, %1 : vector<16x3xf32>
    %cst = arith.constant dense<0.000000e+00> : vector<16xf32>
    %11 = vector.multi_reduction <add>, %10, %cst [1] : vector<16x3xf32> to vector<16xf32>
    %12 = vector.shape_cast %11 : vector<16xf32> to vector<16x1xf32>
    %cst_14 = arith.constant dense<0.000000e+00> : vector<16x8xf32>
    %13 = tpu.matmul %1, %3, %cst_14 {dimension_numbers = #tpu.dot_dimension_numbers<[1], [0], [0], [1], [0, 0, 1, 1], [], []>} : vector<16x3xf32>, vector<3x8xf32>, vector<16x8xf32> -> vector<16x8xf32>
    %cst_15 = arith.constant 2.000000e+00 : f32
    %14 = vector.broadcast %cst_15 : f32 to vector<16x8xf32>
    %15 = arith.mulf %14, %13 : vector<16x8xf32>
    %16 = vector.broadcast %12 : vector<16x1xf32> to vector<16x8xf32>
    %17 = arith.subf %15, %16 : vector<16x8xf32>
    %18 = vector.broadcast %5 : vector<1x8xf32> to vector<16x8xf32>
    %19 = arith.subf %17, %18 : vector<16x8xf32>
    %20 = tpu.iota {dimensions = array<i32: 1>} : vector<1x8xi32>
    %cst_16 = arith.constant 0xFF800000 : f32
    %21 = vector.broadcast %cst_16 : f32 to vector<16x8xf32>
    %cst_17 = arith.constant 0.000000e+00 : f32
    %22 = vector.broadcast %cst_17 : f32 to vector<16x1xf32>
    %cst_18 = arith.constant dense<0xFF800000> : vector<16xf32>
    %23 = vector.multi_reduction <maximumf>, %19, %cst_18 [1] : vector<16x8xf32> to vector<16xf32>
    %24 = vector.shape_cast %23 : vector<16xf32> to vector<16x1xf32>
    %25 = vector.broadcast %24 : vector<16x1xf32> to vector<16x8xf32>
    %26 = arith.cmpf oeq, %19, %25 : vector<16x8xf32>
    %c8_i32 = arith.constant 8 : i32
    %27 = vector.shape_cast %20 : vector<1x8xi32> to vector<1x8xi32>
    %28 = vector.broadcast %27 : vector<1x8xi32> to vector<16x8xi32>
    %29 = vector.broadcast %c8_i32 : i32 to vector<16x8xi32>
    %30 = arith.select %26, %28, %29 : vector<16x8xi1>, vector<16x8xi32>
    %cst_19 = arith.constant dense<2147483647> : vector<16xi32>
    %31 = vector.multi_reduction <minsi>, %30, %cst_19 [1] : vector<16x8xi32> to vector<16xi32>
    %32 = vector.shape_cast %31 : vector<16xi32> to vector<16x1xi32>
    %33 = vector.broadcast %20 : vector<1x8xi32> to vector<16x8xi32>
    %34 = vector.broadcast %32 : vector<16x1xi32> to vector<16x8xi32>
    %35 = arith.cmpi eq, %33, %34 : vector<16x8xi32>
    %cst_20 = arith.constant 1.000000e-10 : f32
    %cst_21 = arith.constant 1.000000e+04 : f32
    %36 = vector.broadcast %cst_20 : f32 to vector<16x1xf32>
    %37 = arith.maximumf %36, %24 : vector<16x1xf32>
    %38 = vector.broadcast %cst_21 : f32 to vector<16x1xf32>
    %39 = arith.minimumf %38, %37 : vector<16x1xf32>
    %40 = tpu.reciprocal %39 : vector<16x1xf32> -> vector<16x1xf32>
    %cst_22 = arith.constant 0.000000e+00 : f32
    %41 = vector.shape_cast %40 : vector<16x1xf32> to vector<16x1xf32>
    %42 = vector.broadcast %41 : vector<16x1xf32> to vector<16x8xf32>
    %43 = vector.broadcast %cst_22 : f32 to vector<16x8xf32>
    %44 = arith.select %35, %42, %43 : vector<16x8xi1>, vector<16x8xf32>
    %cst_23 = arith.constant dense<0.000000e+00> : vector<16x8xf32>
    %45 = tpu.matmul %44, %9, %cst_23 {dimension_numbers = #tpu.dot_dimension_numbers<[1], [0], [0], [1], [0, 0, 1, 1], [], []>} : vector<16x8xf32>, vector<8x8xf32>, vector<16x8xf32> -> vector<16x8xf32>
    %46 = arith.maximumf %21, %45 : vector<16x8xf32>
    %47 = arith.addf %22, %40 : vector<16x1xf32>
    %cst_24 = arith.constant 0xFF800000 : f32
    %48 = vector.broadcast %cst_24 : f32 to vector<16x8xf32>
    %49 = arith.select %35, %48, %19 : vector<16x8xi1>, vector<16x8xf32>
    %cst_25 = arith.constant dense<0xFF800000> : vector<16xf32>
    %50 = vector.multi_reduction <maximumf>, %49, %cst_25 [1] : vector<16x8xf32> to vector<16xf32>
    %51 = vector.shape_cast %50 : vector<16xf32> to vector<16x1xf32>
    %52 = vector.broadcast %51 : vector<16x1xf32> to vector<16x8xf32>
    %53 = arith.cmpf oeq, %49, %52 : vector<16x8xf32>
    %c8_i32_26 = arith.constant 8 : i32
    %54 = vector.shape_cast %20 : vector<1x8xi32> to vector<1x8xi32>
    %55 = vector.broadcast %54 : vector<1x8xi32> to vector<16x8xi32>
    %56 = vector.broadcast %c8_i32_26 : i32 to vector<16x8xi32>
    %57 = arith.select %53, %55, %56 : vector<16x8xi1>, vector<16x8xi32>
    %cst_27 = arith.constant dense<2147483647> : vector<16xi32>
    %58 = vector.multi_reduction <minsi>, %57, %cst_27 [1] : vector<16x8xi32> to vector<16xi32>
    %59 = vector.shape_cast %58 : vector<16xi32> to vector<16x1xi32>
    %60 = vector.broadcast %20 : vector<1x8xi32> to vector<16x8xi32>
    %61 = vector.broadcast %59 : vector<16x1xi32> to vector<16x8xi32>
    %62 = arith.cmpi eq, %60, %61 : vector<16x8xi32>
    %cst_28 = arith.constant 1.000000e-10 : f32
    %cst_29 = arith.constant 1.000000e+04 : f32
    %63 = vector.broadcast %cst_28 : f32 to vector<16x1xf32>
    %64 = arith.maximumf %63, %51 : vector<16x1xf32>
    %65 = vector.broadcast %cst_29 : f32 to vector<16x1xf32>
    %66 = arith.minimumf %65, %64 : vector<16x1xf32>
    %67 = tpu.reciprocal %66 : vector<16x1xf32> -> vector<16x1xf32>
    %cst_30 = arith.constant 0.000000e+00 : f32
    %68 = vector.shape_cast %67 : vector<16x1xf32> to vector<16x1xf32>
    %69 = vector.broadcast %68 : vector<16x1xf32> to vector<16x8xf32>
    %70 = vector.broadcast %cst_30 : f32 to vector<16x8xf32>
    %71 = arith.select %62, %69, %70 : vector<16x8xi1>, vector<16x8xf32>
    %cst_31 = arith.constant dense<0.000000e+00> : vector<16x8xf32>
    %72 = tpu.matmul %71, %9, %cst_31 {dimension_numbers = #tpu.dot_dimension_numbers<[1], [0], [0], [1], [0, 0, 1, 1], [], []>} : vector<16x8xf32>, vector<8x8xf32>, vector<16x8xf32> -> vector<16x8xf32>
    %73 = arith.maximumf %46, %72 : vector<16x8xf32>
    %74 = arith.addf %47, %67 : vector<16x1xf32>
    %cst_32 = arith.constant 0xFF800000 : f32
    %75 = vector.broadcast %cst_32 : f32 to vector<16x8xf32>
    %76 = arith.select %62, %75, %49 : vector<16x8xi1>, vector<16x8xf32>
    %cst_33 = arith.constant dense<0xFF800000> : vector<16xf32>
    %77 = vector.multi_reduction <maximumf>, %76, %cst_33 [1] : vector<16x8xf32> to vector<16xf32>
    %78 = vector.shape_cast %77 : vector<16xf32> to vector<16x1xf32>
    %79 = vector.broadcast %78 : vector<16x1xf32> to vector<16x8xf32>
    %80 = arith.cmpf oeq, %76, %79 : vector<16x8xf32>
    %c8_i32_34 = arith.constant 8 : i32
    %81 = vector.shape_cast %20 : vector<1x8xi32> to vector<1x8xi32>
    %82 = vector.broadcast %81 : vector<1x8xi32> to vector<16x8xi32>
    %83 = vector.broadcast %c8_i32_34 : i32 to vector<16x8xi32>
    %84 = arith.select %80, %82, %83 : vector<16x8xi1>, vector<16x8xi32>
    %cst_35 = arith.constant dense<2147483647> : vector<16xi32>
    %85 = vector.multi_reduction <minsi>, %84, %cst_35 [1] : vector<16x8xi32> to vector<16xi32>
    %86 = vector.shape_cast %85 : vector<16xi32> to vector<16x1xi32>
    %87 = vector.broadcast %20 : vector<1x8xi32> to vector<16x8xi32>
    %88 = vector.broadcast %86 : vector<16x1xi32> to vector<16x8xi32>
    %89 = arith.cmpi eq, %87, %88 : vector<16x8xi32>
    %cst_36 = arith.constant 1.000000e-10 : f32
    %cst_37 = arith.constant 1.000000e+04 : f32
    %90 = vector.broadcast %cst_36 : f32 to vector<16x1xf32>
    %91 = arith.maximumf %90, %78 : vector<16x1xf32>
    %92 = vector.broadcast %cst_37 : f32 to vector<16x1xf32>
    %93 = arith.minimumf %92, %91 : vector<16x1xf32>
    %94 = tpu.reciprocal %93 : vector<16x1xf32> -> vector<16x1xf32>
    %cst_38 = arith.constant 0.000000e+00 : f32
    %95 = vector.shape_cast %94 : vector<16x1xf32> to vector<16x1xf32>
    %96 = vector.broadcast %95 : vector<16x1xf32> to vector<16x8xf32>
    %97 = vector.broadcast %cst_38 : f32 to vector<16x8xf32>
    %98 = arith.select %89, %96, %97 : vector<16x8xi1>, vector<16x8xf32>
    %cst_39 = arith.constant dense<0.000000e+00> : vector<16x8xf32>
    %99 = tpu.matmul %98, %9, %cst_39 {dimension_numbers = #tpu.dot_dimension_numbers<[1], [0], [0], [1], [0, 0, 1, 1], [], []>} : vector<16x8xf32>, vector<8x8xf32>, vector<16x8xf32> -> vector<16x8xf32>
    %100 = arith.maximumf %73, %99 : vector<16x8xf32>
    %101 = arith.addf %74, %94 : vector<16x1xf32>
    %102 = tpu.reciprocal %101 : vector<16x1xf32> -> vector<16x1xf32>
    %103 = vector.broadcast %102 : vector<16x1xf32> to vector<16x8xf32>
    %104 = arith.mulf %100, %103 : vector<16x8xf32>
    %c0_40 = arith.constant 0 : index
    %c0_41 = arith.constant 0 : index
    %105 = vector.load %arg7[%c0_40, %c0_41] : memref<8x32xf32, #tpu.memory_space<vmem>>, vector<8x32xf32>
    %cst_42 = arith.constant dense<0.000000e+00> : vector<16x32xf32>
    %106 = tpu.matmul %104, %105, %cst_42 {dimension_numbers = #tpu.dot_dimension_numbers<[1], [0], [0], [1], [0, 0, 1, 1], [], []>} : vector<16x8xf32>, vector<8x32xf32>, vector<16x32xf32> -> vector<16x32xf32>
    %c0_43 = arith.constant 0 : index
    %c0_44 = arith.constant 0 : index
    %107 = vector.load %arg8[%c0_43, %c0_44] : memref<6x32xf32, #tpu.memory_space<vmem>>, vector<6x32xf32>
    %cst_45 = arith.constant dense<0.000000e+00> : vector<16x32xf32>
    %108 = tpu.matmul %7, %107, %cst_45 {dimension_numbers = #tpu.dot_dimension_numbers<[1], [0], [0], [1], [0, 0, 1, 1], [], []>} : vector<16x6xf32>, vector<6x32xf32>, vector<16x32xf32> -> vector<16x32xf32>
    %109 = arith.addf %106, %108 : vector<16x32xf32>
    %c0_46 = arith.constant 0 : index
    %c0_47 = arith.constant 0 : index
    %110 = vector.load %arg9[%c0_46, %c0_47] : memref<1x32xf32, #tpu.memory_space<vmem>>, vector<1x32xf32>
    %111 = vector.broadcast %110 : vector<1x32xf32> to vector<16x32xf32>
    %112 = arith.addf %109, %111 : vector<16x32xf32>
    %cst_48 = arith.constant 0.000000e+00 : f32
    %113 = vector.broadcast %cst_48 : f32 to vector<16x32xf32>
    %114 = arith.maximumf %112, %113 : vector<16x32xf32>
    %c0_49 = arith.constant 0 : index
    %c0_50 = arith.constant 0 : index
    %115 = vector.load %arg10[%c0_49, %c0_50] : memref<32x32xf32, #tpu.memory_space<vmem>>, vector<32x32xf32>
    %c0_51 = arith.constant 0 : index
    %c0_52 = arith.constant 0 : index
    %116 = vector.load %arg11[%c0_51, %c0_52] : memref<1x32xf32, #tpu.memory_space<vmem>>, vector<1x32xf32>
    %cst_53 = arith.constant dense<0.000000e+00> : vector<16x32xf32>
    %117 = tpu.matmul %114, %115, %cst_53 {dimension_numbers = #tpu.dot_dimension_numbers<[1], [0], [0], [1], [0, 0, 1, 1], [], []>} : vector<16x32xf32>, vector<32x32xf32>, vector<16x32xf32> -> vector<16x32xf32>
    %118 = vector.broadcast %116 : vector<1x32xf32> to vector<16x32xf32>
    %119 = arith.addf %117, %118 : vector<16x32xf32>
    %cst_54 = arith.constant 0.000000e+00 : f32
    %120 = vector.broadcast %cst_54 : f32 to vector<16x32xf32>
    %121 = arith.maximumf %119, %120 : vector<16x32xf32>
    %c0_55 = arith.constant 0 : index
    %c0_56 = arith.constant 0 : index
    %122 = vector.load %arg12[%c0_55, %c0_56] : memref<32x128xf32, #tpu.memory_space<vmem>>, vector<32x128xf32>
    %c0_57 = arith.constant 0 : index
    %c0_58 = arith.constant 0 : index
    %123 = vector.load %arg13[%c0_57, %c0_58] : memref<1x128xf32, #tpu.memory_space<vmem>>, vector<1x128xf32>
    %cst_59 = arith.constant dense<0.000000e+00> : vector<16x128xf32>
    %124 = tpu.matmul %121, %122, %cst_59 {dimension_numbers = #tpu.dot_dimension_numbers<[1], [0], [0], [1], [0, 0, 1, 1], [], []>} : vector<16x32xf32>, vector<32x128xf32>, vector<16x128xf32> -> vector<16x128xf32>
    %125 = vector.broadcast %123 : vector<1x128xf32> to vector<16x128xf32>
    %126 = arith.addf %124, %125 : vector<16x128xf32>
    %cst_60 = arith.constant 0.000000e+00 : f32
    %127 = vector.broadcast %cst_60 : f32 to vector<16x128xf32>
    %128 = arith.maximumf %126, %127 : vector<16x128xf32>
    %c0_61 = arith.constant 0 : index
    %c0_62 = arith.constant 0 : index
    %c0_63 = arith.constant 0 : index
    %129 = vector.load %arg14[%c0_61, %c0_62, %c0_63] : memref<1x16x128xf32, #tpu.memory_space<vmem>>, vector<1x16x128xf32>
    %130 = vector.shape_cast %129 : vector<1x16x128xf32> to vector<16x128xf32>
    %131 = vector.shape_cast %128 : vector<16x128xf32> to vector<1x16x128xf32>
    tpu.vector_store %arg14[%c0_61, %c0_62, %c0_63], %131 {strides = array<i32>} : memref<1x16x128xf32, #tpu.memory_space<vmem>>, vector<1x16x128xf32>,
    return
  }
  func.func @transform_0(%arg0: i32, %arg1: i32) -> (i32, i32, i32) {
    %c0_i32 = arith.constant 0 : i32
    %c0_i32_0 = arith.constant 0 : i32
    return %arg0, %arg1, %c0_i32 : i32, i32, i32
  }
  func.func @transform_1(%arg0: i32, %arg1: i32) -> (i32, i32, i32) {
    %c0_i32 = arith.constant 0 : i32
    %c0_i32_0 = arith.constant 0 : i32
    %c0_i32_1 = arith.constant 0 : i32
    return %arg0, %c0_i32, %c0_i32_0 : i32, i32, i32
  }
  func.func @transform_2(%arg0: i32, %arg1: i32) -> (i32, i32, i32) {
    %c0_i32 = arith.constant 0 : i32
    %c0_i32_0 = arith.constant 0 : i32
    %c0_i32_1 = arith.constant 0 : i32
    return %arg0, %c0_i32, %c0_i32_0 : i32, i32, i32
  }
  func.func @transform_3(%arg0: i32, %arg1: i32) -> (i32, i32, i32) {
    %c0_i32 = arith.constant 0 : i32
    %c0_i32_0 = arith.constant 0 : i32
    return %arg0, %arg1, %c0_i32 : i32, i32, i32
  }
  func.func @transform_4(%arg0: i32, %arg1: i32) -> (i32, i32, i32) {
    %c0_i32 = arith.constant 0 : i32
    %c0_i32_0 = arith.constant 0 : i32
    %c0_i32_1 = arith.constant 0 : i32
    return %arg0, %c0_i32, %c0_i32_0 : i32, i32, i32
  }
  func.func @transform_5(%arg0: i32, %arg1: i32) -> (i32, i32) {
    %c0_i32 = arith.constant 0 : i32
    %c0_i32_0 = arith.constant 0 : i32
    %c0_i32_1 = arith.constant 0 : i32
    return %c0_i32, %c0_i32_0 : i32, i32
  }
  func.func @transform_6(%arg0: i32, %arg1: i32) -> (i32, i32) {
    %c0_i32 = arith.constant 0 : i32
    %c0_i32_0 = arith.constant 0 : i32
    %c0_i32_1 = arith.constant 0 : i32
    return %c0_i32, %c0_i32_0 : i32, i32
  }
  func.func @transform_7(%arg0: i32, %arg1: i32) -> (i32, i32) {
    %c0_i32 = arith.constant 0 : i32
    %c0_i32_0 = arith.constant 0 : i32
    %c0_i32_1 = arith.constant 0 : i32
    return %c0_i32, %c0_i32_0 : i32, i32
  }
  func.func @transform_8(%arg0: i32, %arg1: i32) -> (i32, i32) {
    %c0_i32 = arith.constant 0 : i32
    %c0_i32_0 = arith.constant 0 : i32
    %c0_i32_1 = arith.constant 0 : i32
    return %c0_i32, %c0_i32_0 : i32, i32
  }
  func.func @transform_9(%arg0: i32, %arg1: i32) -> (i32, i32) {
    %c0_i32 = arith.constant 0 : i32
    %c0_i32_0 = arith.constant 0 : i32
    %c0_i32_1 = arith.constant 0 : i32
    return %c0_i32, %c0_i32_0 : i32, i32
  }
  func.func @transform_10(%arg0: i32, %arg1: i32) -> (i32, i32) {
    %c0_i32 = arith.constant 0 : i32
    %c0_i32_0 = arith.constant 0 : i32
    %c0_i32_1 = arith.constant 0 : i32
    return %c0_i32, %c0_i32_0 : i32, i32
  }
  func.func @transform_11(%arg0: i32, %arg1: i32) -> (i32, i32) {
    %c0_i32 = arith.constant 0 : i32
    %c0_i32_0 = arith.constant 0 : i32
    %c0_i32_1 = arith.constant 0 : i32
    return %c0_i32, %c0_i32_0 : i32, i32
  }
  func.func @transform_12(%arg0: i32, %arg1: i32) -> (i32, i32, i32) {
    %c0_i32 = arith.constant 0 : i32
    %c0_i32_0 = arith.constant 0 : i32
    return %arg0, %arg1, %c0_i32 : i32, i32, i32
  }
}

</mosaic_0001>

<llo_original>
// kernel: tpu_custom_call.1
$region0: #{tpu_custom_call.1}
  #allocation0 [shape = 'u32[]', space=smem, size = 0x4, offset = 0x4, fixed_abs, tag = 'smem constant byte address 0x4 - core index']
  #allocation1 [shape = 'u32[144,128]{1,0:T(1,128)}', space=vmem, size = 0x12000, scoped, tag = 'internal scratch']
  %s0 = inlined_call_operand.vmem [shape: f32[2,48,3], index: 0, kind: input, shape index: {}]
  %s1 = inlined_call_operand.vmem [shape: f32[2,3,8], index: 1, kind: input, shape index: {}]
  %s2 = inlined_call_operand.vmem [shape: f32[2,1,8], index: 2, kind: input, shape index: {}]
  %s3 = inlined_call_operand.vmem [shape: f32[2,48,6], index: 3, kind: input, shape index: {}]
  %s4 = inlined_call_operand.vmem [shape: f32[2,8,8], index: 4, kind: input, shape index: {}]
  %s5 = inlined_call_operand.vmem [shape: f32[8,32], index: 5, kind: input, shape index: {}]
  %s6 = inlined_call_operand.vmem [shape: f32[6,32], index: 6, kind: input, shape index: {}]
  %s7 = inlined_call_operand.vmem [shape: f32[1,32], index: 7, kind: input, shape index: {}]
  %s8 = inlined_call_operand.vmem [shape: f32[32,32], index: 8, kind: input, shape index: {}]
  %s9 = inlined_call_operand.vmem [shape: f32[1,32], index: 9, kind: input, shape index: {}]
  %s10 = inlined_call_operand.vmem [shape: f32[32,128], index: 10, kind: input, shape index: {}]
  %s11 = inlined_call_operand.vmem [shape: f32[1,128], index: 11, kind: input, shape index: {}]
  %s12 = inlined_call_operand.hbm [shape: f32[2,48,128], index: 12, kind: output, shape index: {}]
  %s13 = sld [smem:[#allocation0]]
  $region81: #{tpu_custom_call.1} parent=0
    _
  %s15 = ssub.s32 1, %s13
  %s16 = scalar_select 0, %s15, %s13
  $region1: #{tpu_custom_call.1} parent=0
    #allocation2 [shape = 'u8[16384]{0}', space=vmem, size = 0x4000, scoped, tag = 'output window, operand 0']
    #allocation3 [shape = 's32[2]{0}', space=sflag, size = 0x8, scoped, tag = 'scoped memory for tpu_custom_call.1']
    %17 = vsyncpa [#allocation3], 0
    %s18 = scalar_lea.sflag [#allocation3], 1
    %19 = vsyncpa %s18, 0
    loop: start=0, step=1, limit=8
    $region2: #{tpu_custom_call.1} parent=1 // loop_pre_header
      _
    $region3: #{tpu_custom_call.1} parent=1 // loop_header
      %s21 = sphi 0, %s25
      %p22 = scmp.ge.s32.totalorder %s21, 8
      %s28 = sphi 0, %s40
      %s29 = sphi 0, %s36
      %s30 = sphi 0, %s28
      %s31 = sphi 0, %s29
      %s32 = sphi 0, %s30
      %s33 = sphi 0, %s31
      %s45 = sphi 0, %s47
      %s48 = sphi 0, %s45
      %s49 = sphi 0, %s48
      %s65 = sphi 0, %s49
      %s71 = sphi 0, %s73
      %s74 = sphi 0, %s71
      %s75 = sphi 0, %s74
      %s91 = sphi 0, %s75
      %s97 = sphi 0, %s99
      %s100 = sphi 0, %s97
      %s101 = sphi 0, %s100
      %s117 = sphi 0, %s101
      %s125 = sphi 0, %s127
      %s128 = sphi 0, %s125
      %s129 = sphi 0, %s128
      %s145 = sphi 0, %s129
      %s151 = sphi 0, %s153
      %s154 = sphi 0, %s151
      %s155 = sphi 0, %s154
      %s171 = sphi 0, %s155
      %s175 = sphi 0, %s175
      %s177 = sphi 0, %s175
      %s178 = sphi 0, %s177
      %s192 = sphi 0, %s178
      %s196 = sphi 0, %s196
      %s198 = sphi 0, %s196
      %s199 = sphi 0, %s198
      %s213 = sphi 0, %s199
      %s217 = sphi 0, %s217
      %s219 = sphi 0, %s217
      %s220 = sphi 0, %s219
      %s234 = sphi 0, %s220
      %s238 = sphi 0, %s238
      %s240 = sphi 0, %s238
      %s241 = sphi 0, %s240
      %s255 = sphi 0, %s241
      %s259 = sphi 0, %s259
      %s261 = sphi 0, %s259
      %s262 = sphi 0, %s261
      %s276 = sphi 0, %s262
      %s280 = sphi 0, %s280
      %s282 = sphi 0, %s280
      %s283 = sphi 0, %s282
      %s297 = sphi 0, %s283
      %s301 = sphi 0, %s301
      %s303 = sphi 0, %s301
      %s304 = sphi 0, %s303
      %s318 = sphi 0, %s304
      %s326 = sphi 0, %s328
      %s329 = sphi 0, %s326
      %s330 = sphi 0, %s329
      %s346 = sphi 0, %s330
    $region4: #{tpu_custom_call.1} parent=1 // loop_header_branch
      %24 = sbr.rel (%p22) target = $region8
    $region5: #{tpu_custom_call.1} parent=1 // loop_body
      %s26 = ssub.s32 %s21, 1
      %s27 = ssub.s32 %s21, 2
      %s34 = sadd.s32 1, %s29
      %p35 = scmp.ge.s32.totalorder %s34, 3
      %s36 = scalar_select %p35, 0, %s34
      %s37 = sadd.s32 1, %s28
      %s38 = scalar_select %p35, %s37, %s28
      %p39 = scmp.ge.s32.totalorder %s38, 2
      %s40 = scalar_select %p39, 0, %s38
      %s41 = ssub.s32 %s28, %s40
      %s42 = ssub.s32 %s29, %s36
      %s43 = sor.u32 %s41, %s42
      %p44 = scmp.eq.s32.totalorder %s43, 0
      %s46 = sadd.s32 %s45, 1
      %s47 = scalar_select %p44, %s45, %s46
      %p50 = pneg %p44
      %p51 = scmp.eq.s32.totalorder %s21, 5
      %p52 = por %p50, %p51
      %p53 = scmp.ne.s32.totalorder %s45, %s48
      %p54 = scmp.eq.s32.totalorder %s21, 0
      %p55 = por %p53, %p54
      %p56 = scmp.ne.s32.totalorder %s45, %s48
      %p57 = scmp.eq.s32.totalorder %s26, 5
      %p58 = por %p56, %p57
      %p59 = scmp.ne.s32.totalorder %s48, %s49
      %p60 = scmp.eq.s32.totalorder %s26, 0
      %p61 = por %p59, %p60
      %p62 = scmp.ne.s32.totalorder %s48, %s49
      %p63 = scmp.eq.s32.totalorder %s27, 5
      %p64 = por %p62, %p63
      %p66 = scmp.ne.s32.totalorder %s49, %s65
      %p67 = scmp.eq.s32.totalorder %s27, 0
      %p68 = por %p66, %p67
      %s69 = ssub.s32 %s28, %s40
      %p70 = scmp.eq.s32.totalorder %s69, 0
      %s72 = sadd.s32 %s71, 1
      %s73 = scalar_select %p70, %s71, %s72
      %p76 = pneg %p70
      %p77 = scmp.eq.s32.totalorder %s21, 5
      %p78 = por %p76, %p77
      %p79 = scmp.ne.s32.totalorder %s71, %s74
      %p80 = scmp.eq.s32.totalorder %s21, 0
      %p81 = por %p79, %p80
      %p82 = scmp.ne.s32.totalorder %s71, %s74
      %p83 = scmp.eq.s32.totalorder %s26, 5
      %p84 = por %p82, %p83
      %p85 = scmp.ne.s32.totalorder %s74, %s75
      %p86 = scmp.eq.s32.totalorder %s26, 0
      %p87 = por %p85, %p86
      %p88 = scmp.ne.s32.totalorder %s74, %s75
      %p89 = scmp.eq.s32.totalorder %s27, 5
      %p90 = por %p88, %p89
      %p92 = scmp.ne.s32.totalorder %s75, %s91
      %p93 = scmp.eq.s32.totalorder %s27, 0
      %p94 = por %p92, %p93
      %s95 = ssub.s32 %s28, %s40
      %p96 = scmp.eq.s32.totalorder %s95, 0
      %s98 = sadd.s32 %s97, 1
      %s99 = scalar_select %p96, %s97, %s98
      %p102 = pneg %p96
      %p103 = scmp.eq.s32.totalorder %s21, 5
      %p104 = por %p102, %p103
      %p105 = scmp.ne.s32.totalorder %s97, %s100
      %p106 = scmp.eq.s32.totalorder %s21, 0
      %p107 = por %p105, %p106
      %p108 = scmp.ne.s32.totalorder %s97, %s100
      %p109 = scmp.eq.s32.totalorder %s26, 5
      %p110 = por %p108, %p109
      %p111 = scmp.ne.s32.totalorder %s100, %s101
      %p112 = scmp.eq.s32.totalorder %s26, 0
      %p113 = por %p111, %p112
      %p114 = scmp.ne.s32.totalorder %s100, %s101
      %p115 = scmp.eq.s32.totalorder %s27, 5
      %p116 = por %p114, %p115
      %p118 = scmp.ne.s32.totalorder %s101, %s117
      %p119 = scmp.eq.s32.totalorder %s27, 0
      %p120 = por %p118, %p119
      %s121 = ssub.s32 %s28, %s40
      %s122 = ssub.s32 %s29, %s36
      %s123 = sor.u32 %s121, %s122
      %p124 = scmp.eq.s32.totalorder %s123, 0
      %s126 = sadd.s32 %s125, 1
      %s127 = scalar_select %p124, %s125, %s126
      %p130 = pneg %p124
      %p131 = scmp.eq.s32.totalorder %s21, 5
      %p132 = por %p130, %p131
      %p133 = scmp.ne.s32.totalorder %s125, %s128
      %p134 = scmp.eq.s32.totalorder %s21, 0
      %p135 = por %p133, %p134
      %p136 = scmp.ne.s32.totalorder %s125, %s128
      %p137 = scmp.eq.s32.totalorder %s26, 5
      %p138 = por %p136, %p137
      %p139 = scmp.ne.s32.totalorder %s128, %s129
      %p140 = scmp.eq.s32.totalorder %s26, 0
      %p141 = por %p139, %p140
      %p142 = scmp.ne.s32.totalorder %s128, %s129
      %p143 = scmp.eq.s32.totalorder %s27, 5
      %p144 = por %p142, %p143
      %p146 = scmp.ne.s32.totalorder %s129, %s145
      %p147 = scmp.eq.s32.totalorder %s27, 0
      %p148 = por %p146, %p147
      %s149 = ssub.s32 %s28, %s40
      %p150 = scmp.eq.s32.totalorder %s149, 0
      %s152 = sadd.s32 %s151, 1
      %s153 = scalar_select %p150, %s151, %s152
      %p156 = pneg %p150
      %p157 = scmp.eq.s32.totalorder %s21, 5
      %p158 = por %p156, %p157
      %p159 = scmp.ne.s32.totalorder %s151, %s154
      %p160 = scmp.eq.s32.totalorder %s21, 0
      %p161 = por %p159, %p160
      %p162 = scmp.ne.s32.totalorder %s151, %s154
      %p163 = scmp.eq.s32.totalorder %s26, 5
      %p164 = por %p162, %p163
      %p165 = scmp.ne.s32.totalorder %s154, %s155
      %p166 = scmp.eq.s32.totalorder %s26, 0
      %p167 = por %p165, %p166
      %p168 = scmp.ne.s32.totalorder %s154, %s155
      %p169 = scmp.eq.s32.totalorder %s27, 5
      %p170 = por %p168, %p169
      %p172 = scmp.ne.s32.totalorder %s155, %s171
      %p173 = scmp.eq.s32.totalorder %s27, 0
      %p174 = por %p172, %p173
      %s176 = sadd.s32 %s175, 1
      %p179 = scmp.eq.s32.totalorder %s21, 5
      %p180 = scmp.ne.s32.totalorder %s175, %s177
      %p181 = scmp.eq.s32.totalorder %s21, 0
      %p182 = por %p180, %p181
      %p183 = scmp.ne.s32.totalorder %s175, %s177
      %p184 = scmp.eq.s32.totalorder %s26, 5
      %p185 = por %p183, %p184
      %p186 = scmp.ne.s32.totalorder %s177, %s178
      %p187 = scmp.eq.s32.totalorder %s26, 0
      %p188 = por %p186, %p187
      %p189 = scmp.ne.s32.totalorder %s177, %s178
      %p190 = scmp.eq.s32.totalorder %s27, 5
      %p191 = por %p189, %p190
      %p193 = scmp.ne.s32.totalorder %s178, %s192
      %p194 = scmp.eq.s32.totalorder %s27, 0
      %p195 = por %p193, %p194
      %s197 = sadd.s32 %s196, 1
      %p200 = scmp.eq.s32.totalorder %s21, 5
      %p201 = scmp.ne.s32.totalorder %s196, %s198
      %p202 = scmp.eq.s32.totalorder %s21, 0
      %p203 = por %p201, %p202
      %p204 = scmp.ne.s32.totalorder %s196, %s198
      %p205 = scmp.eq.s32.totalorder %s26, 5
      %p206 = por %p204, %p205
      %p207 = scmp.ne.s32.totalorder %s198, %s199
      %p208 = scmp.eq.s32.totalorder %s26, 0
      %p209 = por %p207, %p208
      %p210 = scmp.ne.s32.totalorder %s198, %s199
      %p211 = scmp.eq.s32.totalorder %s27, 5
      %p212 = por %p210, %p211
      %p214 = scmp.ne.s32.totalorder %s199, %s213
      %p215 = scmp.eq.s32.totalorder %s27, 0
      %p216 = por %p214, %p215
      %s218 = sadd.s32 %s217, 1
      %p221 = scmp.eq.s32.totalorder %s21, 5
      %p222 = scmp.ne.s32.totalorder %s217, %s219
      %p223 = scmp.eq.s32.totalorder %s21, 0
      %p224 = por %p222, %p223
      %p225 = scmp.ne.s32.totalorder %s217, %s219
      %p226 = scmp.eq.s32.totalorder %s26, 5
      %p227 = por %p225, %p226
      %p228 = scmp.ne.s32.totalorder %s219, %s220
      %p229 = scmp.eq.s32.totalorder %s26, 0
      %p230 = por %p228, %p229
      %p231 = scmp.ne.s32.totalorder %s219, %s220
      %p232 = scmp.eq.s32.totalorder %s27, 5
      %p233 = por %p231, %p232
      %p235 = scmp.ne.s32.totalorder %s220, %s234
      %p236 = scmp.eq.s32.totalorder %s27, 0
      %p237 = por %p235, %p236
      %s239 = sadd.s32 %s238, 1
      %p242 = scmp.eq.s32.totalorder %s21, 5
      %p243 = scmp.ne.s32.totalorder %s238, %s240
      %p244 = scmp.eq.s32.totalorder %s21, 0
      %p245 = por %p243, %p244
      %p246 = scmp.ne.s32.totalorder %s238, %s240
      %p247 = scmp.eq.s32.totalorder %s26, 5
      %p248 = por %p246, %p247
      %p249 = scmp.ne.s32.totalorder %s240, %s241
      %p250 = scmp.eq.s32.totalorder %s26, 0
      %p251 = por %p249, %p250
      %p252 = scmp.ne.s32.totalorder %s240, %s241
      %p253 = scmp.eq.s32.totalorder %s27, 5
      %p254 = por %p252, %p253
      %p256 = scmp.ne.s32.totalorder %s241, %s255
      %p257 = scmp.eq.s32.totalorder %s27, 0
      %p258 = por %p256, %p257
      %s260 = sadd.s32 %s259, 1
      %p263 = scmp.eq.s32.totalorder %s21, 5
      %p264 = scmp.ne.s32.totalorder %s259, %s261
      %p265 = scmp.eq.s32.totalorder %s21, 0
      %p266 = por %p264, %p265
      %p267 = scmp.ne.s32.totalorder %s259, %s261
      %p268 = scmp.eq.s32.totalorder %s26, 5
      %p269 = por %p267, %p268
      %p270 = scmp.ne.s32.totalorder %s261, %s262
      %p271 = scmp.eq.s32.totalorder %s26, 0
      %p272 = por %p270, %p271
      %p273 = scmp.ne.s32.totalorder %s261, %s262
      %p274 = scmp.eq.s32.totalorder %s27, 5
      %p275 = por %p273, %p274
      %p277 = scmp.ne.s32.totalorder %s262, %s276
      %p278 = scmp.eq.s32.totalorder %s27, 0
      %p279 = por %p277, %p278
      %s281 = sadd.s32 %s280, 1
      %p284 = scmp.eq.s32.totalorder %s21, 5
      %p285 = scmp.ne.s32.totalorder %s280, %s282
      %p286 = scmp.eq.s32.totalorder %s21, 0
      %p287 = por %p285, %p286
      %p288 = scmp.ne.s32.totalorder %s280, %s282
      %p289 = scmp.eq.s32.totalorder %s26, 5
      %p290 = por %p288, %p289
      %p291 = scmp.ne.s32.totalorder %s282, %s283
      %p292 = scmp.eq.s32.totalorder %s26, 0
      %p293 = por %p291, %p292
      %p294 = scmp.ne.s32.totalorder %s282, %s283
      %p295 = scmp.eq.s32.totalorder %s27, 5
      %p296 = por %p294, %p295
      %p298 = scmp.ne.s32.totalorder %s283, %s297
      %p299 = scmp.eq.s32.totalorder %s27, 0
      %p300 = por %p298, %p299
      %s302 = sadd.s32 %s301, 1
      %p305 = scmp.eq.s32.totalorder %s21, 5
      %p306 = scmp.ne.s32.totalorder %s301, %s303
      %p307 = scmp.eq.s32.totalorder %s21, 0
      %p308 = por %p306, %p307
      %p309 = scmp.ne.s32.totalorder %s301, %s303
      %p310 = scmp.eq.s32.totalorder %s26, 5
      %p311 = por %p309, %p310
      %p312 = scmp.ne.s32.totalorder %s303, %s304
      %p313 = scmp.eq.s32.totalorder %s26, 0
      %p314 = por %p312, %p313
      %p315 = scmp.ne.s32.totalorder %s303, %s304
      %p316 = scmp.eq.s32.totalorder %s27, 5
      %p317 = por %p315, %p316
      %p319 = scmp.ne.s32.totalorder %s304, %s318
      %p320 = scmp.eq.s32.totalorder %s27, 0
      %p321 = por %p319, %p320
      %s322 = ssub.s32 %s28, %s40
      %s323 = ssub.s32 %s29, %s36
      %s324 = sor.u32 %s322, %s323
      %p325 = scmp.eq.s32.totalorder %s324, 0
      %s327 = sadd.s32 %s326, 1
      %s328 = scalar_select %p325, %s326, %s327
      %p331 = pneg %p325
      %p332 = scmp.eq.s32.totalorder %s21, 5
      %p333 = por %p331, %p332
      %p334 = scmp.ne.s32.totalorder %s326, %s329
      %p335 = scmp.eq.s32.totalorder %s21, 0
      %p336 = por %p334, %p335
      %p337 = scmp.ne.s32.totalorder %s326, %s329
      %p338 = scmp.eq.s32.totalorder %s26, 5
      %p339 = por %p337, %p338
      %p340 = scmp.ne.s32.totalorder %s329, %s330
      %p341 = scmp.eq.s32.totalorder %s26, 0
      %p342 = por %p340, %p341
      %p343 = scmp.ne.s32.totalorder %s329, %s330
      %p344 = scmp.eq.s32.totalorder %s27, 5
      %p345 = por %p343, %p344
      %p347 = scmp.ne.s32.totalorder %s330, %s346
      %p348 = scmp.eq.s32.totalorder %s27, 0
      %p349 = por %p347, %p348
      %p350 = scmp.le.s32.totalorder 1, %s21
      %p351 = scmp.lt.s32.totalorder %s21, 7
      %p352 = pnand %p350, %p351
      %p353 = pneg %p352
      // Predicated region
      $region9: #{tpu_custom_call.1} parent=5 // pred_check
        _
      $region10: #{tpu_custom_call.1} parent=5 // pred_check_branch
        %355 = sbr.rel (%p352) target = $region12
      $region11: #{tpu_custom_call.1} parent=5 // pred_region
        %s356 = ssub.s32 %s21, 1
        // Predicated region
        $region13: #{tpu_custom_call.1} parent=11 // pred_check
          %p357 = pneg %p188
        $region14: #{tpu_custom_call.1} parent=11 // pred_check_branch
          %359 = sbr.rel (%p357) target = $region16
        $region15: #{tpu_custom_call.1} parent=11 // pred_region
          _
        $region16: #{tpu_custom_call.1} parent=11 // pred_fallthru
          _
        // Predicated region
        $region17: #{tpu_custom_call.1} parent=11 // pred_check
          %p360 = pneg %p209
        $region18: #{tpu_custom_call.1} parent=11 // pred_check_branch
          %362 = sbr.rel (%p360) target = $region20
        $region19: #{tpu_custom_call.1} parent=11 // pred_region
          _
        $region20: #{tpu_custom_call.1} parent=11 // pred_fallthru
          _
        // Predicated region
        $region21: #{tpu_custom_call.1} parent=11 // pred_check
          %p363 = pneg %p230
        $region22: #{tpu_custom_call.1} parent=11 // pred_check_branch
          %365 = sbr.rel (%p363) target = $region24
        $region23: #{tpu_custom_call.1} parent=11 // pred_region
          _
        $region24: #{tpu_custom_call.1} parent=11 // pred_fallthru
          _
        // Predicated region
        $region25: #{tpu_custom_call.1} parent=11 // pred_check
          %p366 = pneg %p251
        $region26: #{tpu_custom_call.1} parent=11 // pred_check_branch
          %368 = sbr.rel (%p366) target = $region28
        $region27: #{tpu_custom_call.1} parent=11 // pred_region
          _
        $region28: #{tpu_custom_call.1} parent=11 // pred_fallthru
          _
        // Predicated region
        $region29: #{tpu_custom_call.1} parent=11 // pred_check
          %p369 = pneg %p272
        $region30: #{tpu_custom_call.1} parent=11 // pred_check_branch
          %371 = sbr.rel (%p369) target = $region32
        $region31: #{tpu_custom_call.1} parent=11 // pred_region
          _
        $region32: #{tpu_custom_call.1} parent=11 // pred_fallthru
          _
        // Predicated region
        $region33: #{tpu_custom_call.1} parent=11 // pred_check
          %p372 = pneg %p293
        $region34: #{tpu_custom_call.1} parent=11 // pred_check_branch
          %374 = sbr.rel (%p372) target = $region36
        $region35: #{tpu_custom_call.1} parent=11 // pred_region
          _
        $region36: #{tpu_custom_call.1} parent=11 // pred_fallthru
          _
        // Predicated region
        $region37: #{tpu_custom_call.1} parent=11 // pred_check
          %p375 = pneg %p314
        $region38: #{tpu_custom_call.1} parent=11 // pred_check_branch
          %377 = sbr.rel (%p375) target = $region40
        $region39: #{tpu_custom_call.1} parent=11 // pred_region
          _
        $region40: #{tpu_custom_call.1} parent=11 // pred_fallthru
          _
      $region12: #{tpu_custom_call.1} parent=5 // pred_fallthru
        _
      %p378 = scmp.lt.s32.totalorder %s21, 6
      // Predicated region
      $region41: #{tpu_custom_call.1} parent=5 // pred_check
        %p379 = pneg %p378
      $region42: #{tpu_custom_call.1} parent=5 // pred_check_branch
        %381 = sbr.rel (%p379) target = $region44
      $region43: #{tpu_custom_call.1} parent=5 // pred_region
        // Predicated region
        $region45: #{tpu_custom_call.1} parent=43 // pred_check
          %p382 = pneg %p55
        $region46: #{tpu_custom_call.1} parent=43 // pred_check_branch
          %384 = sbr.rel (%p382) target = $region48
        $region47: #{tpu_custom_call.1} parent=43 // pred_region
          %s385 = smul.u32 2, %s29
          %p386 = scmp.lt.s32.totalorder %s28, 1
          %s387 = scalar_select %p386, %s28, 1
          %p388 = scmp.lt.s32.totalorder %s385, 5
          %s389 = scalar_select %p388, %s385, 5
          %s390 = smul.addr %s387, 6
          %s391 = sadd.s32 %s389, %s390
          %s392 = smul.addr %s391, 8
          %s393 = scalar_lea.vmem %s0, %s392
          %s394 = smul.u32 2, %s29
        $region48: #{tpu_custom_call.1} parent=43 // pred_fallthru
          _
        // Predicated region
        $region49: #{tpu_custom_call.1} parent=43 // pred_check
          %p395 = pneg %p81
        $region50: #{tpu_custom_call.1} parent=43 // pred_check_branch
          %397 = sbr.rel (%p395) target = $region52
        $region51: #{tpu_custom_call.1} parent=43 // pred_region
          %p398 = scmp.lt.s32.totalorder %s28, 1
          %s399 = scalar_select %p398, %s28, 1
          %s400 = smul.addr %s399, 4
          %s401 = scalar_lea.vmem %s1, %s400
        $region52: #{tpu_custom_call.1} parent=43 // pred_fallthru
          _
        // Predicated region
        $region53: #{tpu_custom_call.1} parent=43 // pred_check
          %p402 = pneg %p107
        $region54: #{tpu_custom_call.1} parent=43 // pred_check_branch
          %404 = sbr.rel (%p402) target = $region56
        $region55: #{tpu_custom_call.1} parent=43 // pred_region
          %p405 = scmp.lt.s32.totalorder %s28, 1
          %s406 = scalar_select %p405, %s28, 1
          %s407 = scalar_lea.vmem %s2, %s406
        $region56: #{tpu_custom_call.1} parent=43 // pred_fallthru
          _
        // Predicated region
        $region57: #{tpu_custom_call.1} parent=43 // pred_check
          %p408 = pneg %p135
        $region58: #{tpu_custom_call.1} parent=43 // pred_check_branch
          %410 = sbr.rel (%p408) target = $region60
        $region59: #{tpu_custom_call.1} parent=43 // pred_region
          %s411 = smul.u32 2, %s29
          %p412 = scmp.lt.s32.totalorder %s28, 1
          %s413 = scalar_select %p412, %s28, 1
          %p414 = scmp.lt.s32.totalorder %s411, 5
          %s415 = scalar_select %p414, %s411, 5
          %s416 = smul.addr %s413, 6
          %s417 = sadd.s32 %s415, %s416
          %s418 = smul.addr %s417, 8
          %s419 = scalar_lea.vmem %s3, %s418
          %s420 = smul.u32 2, %s29
        $region60: #{tpu_custom_call.1} parent=43 // pred_fallthru
          _
        // Predicated region
        $region61: #{tpu_custom_call.1} parent=43 // pred_check
          %p421 = pneg %p161
        $region62: #{tpu_custom_call.1} parent=43 // pred_check_branch
          %423 = sbr.rel (%p421) target = $region64
        $region63: #{tpu_custom_call.1} parent=43 // pred_region
          %p424 = scmp.lt.s32.totalorder %s28, 1
          %s425 = scalar_select %p424, %s28, 1
          %s426 = smul.addr %s425, 8
          %s427 = scalar_lea.vmem %s4, %s426
        $region64: #{tpu_custom_call.1} parent=43 // pred_fallthru
          _
      $region44: #{tpu_custom_call.1} parent=5 // pred_fallthru
        _
      %p428 = scmp.le.s32.totalorder 1, %s21
      %p429 = scmp.lt.s32.totalorder %s21, 7
      %p430 = pnand %p428, %p429
      %p431 = pneg %p430
      // Predicated region
      $region65: #{tpu_custom_call.1} parent=5 // pred_check
        _
      $region66: #{tpu_custom_call.1} parent=5 // pred_check_branch
        %433 = sbr.rel (%p430) target = $region68
      $region67: #{tpu_custom_call.1} parent=5 // pred_region
        %s434 = ssub.s32 %s21, 1
        %s435 = smul.u32 2, %s31
        %p436 = scmp.lt.s32.totalorder %s30, 1
        %s437 = scalar_select %p436, %s30, 1
        %p438 = scmp.lt.s32.totalorder %s435, 5
        %s439 = scalar_select %p438, %s435, 5
        %s440 = smul.addr %s437, 6
        %s441 = sadd.s32 %s439, %s440
        %s442 = smul.addr %s441, 8
        %s443 = scalar_lea.vmem %s0, %s442
        %p444 = pneg %p61
        %p445 = pneg %p58
        %p446 = scmp.lt.s32.totalorder %s30, 1
        %s447 = scalar_select %p446, %s30, 1
        %s448 = smul.addr %s447, 4
        %s449 = scalar_lea.vmem %s1, %s448
        %p450 = pneg %p87
        %p451 = pneg %p84
        %p452 = scmp.lt.s32.totalorder %s30, 1
        %s453 = scalar_select %p452, %s30, 1
        %s454 = scalar_lea.vmem %s2, %s453
        %p455 = pneg %p113
        %p456 = pneg %p110
        %s457 = smul.u32 2, %s31
        %p458 = scmp.lt.s32.totalorder %s30, 1
        %s459 = scalar_select %p458, %s30, 1
        %p460 = scmp.lt.s32.totalorder %s457, 5
        %s461 = scalar_select %p460, %s457, 5
        %s462 = smul.addr %s459, 6
        %s463 = sadd.s32 %s461, %s462
        %s464 = smul.addr %s463, 8
        %s465 = scalar_lea.vmem %s3, %s464
        %p466 = pneg %p141
        %p467 = pneg %p138
        %p468 = scmp.lt.s32.totalorder %s30, 1
        %s469 = scalar_select %p468, %s30, 1
        %s470 = smul.addr %s469, 8
        %s471 = scalar_lea.vmem %s4, %s470
        %p472 = pneg %p167
        %p473 = pneg %p164
        %p474 = pneg %p188
        %p475 = pneg %p185
        %p476 = pneg %p209
        %p477 = pneg %p206
        %p478 = pneg %p230
        %p479 = pneg %p227
        %p480 = pneg %p251
        %p481 = pneg %p248
        %p482 = pneg %p272
        %p483 = pneg %p269
        %p484 = pneg %p293
        %p485 = pneg %p290
        %p486 = pneg %p314
        %p487 = pneg %p311
        %p488 = pneg %p342
        %p489 = pneg %p339
        %s490 = sand.u32 %s329, 1
        %s491 = scalar_lea.sflag [#allocation3], %s490
        %s492 = sand.u32 %s329, 1
        %s493 = smul.addr %s492, 16
        %s494 = scalar_lea.vmem [#allocation2], %s493
        %s495 = smul.u32 2, %s31
        %p496 = scmp.lt.s32.totalorder %s30, 1
        %s497 = scalar_select %p496, %s30, 1
        %p498 = scmp.lt.s32.totalorder %s495, 5
        %s499 = scalar_select %p498, %s495, 5
        %s500 = smul.addr %s497, 6
        %s501 = sadd.s32 %s499, %s500
        %s502 = smul.addr %s501, 8
        %s503 = scalar_lea.vmem %s0, %s502
        %s504 = smul.u32 2, %s31
        %p505 = scmp.lt.s32.totalorder %s30, 1
        %s506 = scalar_select %p505, %s30, 1
        %s507 = smul.addr %s506, 4
        %s508 = scalar_lea.vmem %s1, %s507
        %p509 = scmp.lt.s32.totalorder %s30, 1
        %s510 = scalar_select %p509, %s30, 1
        %s511 = scalar_lea.vmem %s2, %s510
        %s512 = smul.u32 2, %s31
        %p513 = scmp.lt.s32.totalorder %s30, 1
        %s514 = scalar_select %p513, %s30, 1
        %p515 = scmp.lt.s32.totalorder %s512, 5
        %s516 = scalar_select %p515, %s512, 5
        %s517 = smul.addr %s514, 6
        %s518 = sadd.s32 %s516, %s517
        %s519 = smul.addr %s518, 8
        %s520 = scalar_lea.vmem %s3, %s519
        %s521 = smul.u32 2, %s31
        %p522 = scmp.lt.s32.totalorder %s30, 1
        %s523 = scalar_select %p522, %s30, 1
        %s524 = smul.addr %s523, 8
        %s525 = scalar_lea.vmem %s4, %s524
        %s526 = smul.u32 2, %s31
        %v527 = vld [vmem:[%s503] sm:$0xff]
        %v528 = vld [vmem:[%s503 + $0x8] sm:$0xff]
        %v529 = vld [vmem:[%s508] sm:$0x7]
        %v530 = vld [vmem:[%s511] sm:$0x1]
        %v531 = vld [vmem:[%s520] sm:$0xff]
        %v532 = vld [vmem:[%s520 + $0x8] sm:$0xff]
        %v533 = vld [vmem:[%s525] sm:$0xff]
        %v534 = vmul.f32 %v527, %v527
        %v535 = vmul.f32 %v528, %v528
        %vm536 = vcmask 23552
        %v537 = vsel %vm536, %v534, 0.0
        %538 = vadd.xlane.f32.xlu0 %v537
        %v539 = vpop.xlane.xlu0 %538
        %v540 = vsel %vm536, %v535, 0.0
        %541 = vadd.xlane.f32.xlu0 %v540
        %v542 = vpop.xlane.xlu0 %541
        %v544 = vsel %vm536, %v527, 0
        %v547 = vsel %vm536, %v528, 0
        %vm549 = vcmask 1042432
        %v551 = vsel %vm549, %v529, 0
        %553 = vmatprep.subr.mxu0 0.0
        %554 = vmatpush1.msra.mxu0 %v551
        %555 = vmatprep.subr.mxu0 0.0
        %556 = vmatpush1.msra.mxu0 0.0
        %557 = vmatprep.subr.mxu0 0.0
        %558 = vmatpush1.msra.mxu0 0.0
        %559 = vmatprep.subr.mxu0 0.0
        %560 = vmatpush1.msra.mxu0 0.0
        %561 = vmatprep.subr.mxu0 0.0
        %562 = vmatpush1.msra.mxu0 0.0
        %563 = vmatprep.subr.mxu0 0.0
        %564 = vmatpush1.msra.mxu0 0.0
        %565 = vmatprep.subr.mxu0 0.0
        %566 = vmatpush1.msra.mxu0 0.0
        %567 = vmatprep.subr.mxu0 0.0
        %568 = vmatpush1.msra.mxu0 0.0
        %569 = vmatprep.subr.mxu0 0.0
        %570 = vmatpush1.msra.mxu0 0.0
        %571 = vmatprep.subr.mxu0 0.0
        %572 = vmatpush1.msra.mxu0 0.0
        %573 = vmatprep.subr.mxu0 0.0
        %574 = vmatpush1.msra.mxu0 0.0
        %575 = vmatprep.subr.mxu0 0.0
        %576 = vmatpush1.msra.mxu0 0.0
        %577 = vmatprep.subr.mxu0 0.0
        %578 = vmatpush1.msra.mxu0 0.0
        %579 = vmatprep.subr.mxu0 0.0
        %580 = vmatpush1.msra.mxu0 0.0
        %581 = vmatprep.subr.mxu0 0.0
        %582 = vmatpush1.msra.mxu0 0.0
        %583 = vmatprep.subr.mxu0 0.0
        %584 = vmatpush1.msra.mxu0 0.0
        %585 = vmatprep.subr.mxu0 0.0
        %586 = vmatpush1.msra.mxu0 0.0
        %587 = vmatprep.subr.mxu0 0.0
        %588 = vmatpush1.msra.mxu0 0.0
        %589 = vmatprep.subr.mxu0 0.0
        %590 = vmatpush1.msra.mxu0 0.0
        %591 = vmatprep.subr.mxu0 0.0
        %592 = vmatpush1.msra.mxu0 0.0
        %593 = vmatprep.subr.mxu0 0.0
        %594 = vmatpush1.msra.mxu0 0.0
        %595 = vmatprep.subr.mxu0 0.0
        %596 = vmatpush1.msra.mxu0 0.0
        %597 = vmatprep.subr.mxu0 0.0
        %598 = vmatpush1.msra.mxu0 0.0
        %599 = vmatprep.subr.mxu0 0.0
        %600 = vmatpush1.msra.mxu0 0.0
        %601 = vmatprep.subr.mxu0 0.0
        %602 = vmatpush1.msra.mxu0 0.0
        %603 = vmatprep.subr.mxu0 0.0
        %604 = vmatpush1.msra.mxu0 0.0
        %605 = vmatprep.subr.mxu0 0.0
        %606 = vmatpush1.msra.mxu0 0.0
        %607 = vmatprep.subr.mxu0 0.0
        %608 = vmatpush1.msra.mxu0 0.0
        %609 = vmatprep.subr.mxu0 0.0
        %610 = vmatpush1.msra.mxu0 0.0
        %611 = vmatprep.subr.mxu0 0.0
        %612 = vmatpush1.msra.mxu0 0.0
        %613 = vmatprep.subr.mxu0 0.0
        %614 = vmatpush1.msra.mxu0 0.0
        %615 = vmatprep.subr.mxu0 0.0
        %616 = vmatpush1.msra.mxu0 0.0
        %617 = vmatprep.mubr.f32.mxu0 0.0
        %618 = vmatmul.mubr.f32.gmra.mrb[0].mxu0 %v544
        %v619 = vpop.f32.mrb[0].mxu0
        %v620 = vadd.f32 0.0, %v619
        %v621 = vpop.f32.mrb[0].mxu0
        %622 = vmatprep.mubr.f32.mxu0 0.0
        %623 = vmatmul.mubr.f32.gmra.mrb[0].mxu0 %v547
        %v624 = vpop.f32.mrb[0].mxu0
        %v625 = vadd.f32 0.0, %v624
        %v626 = vpop.f32.mrb[0].mxu0
        %627 = vdwg.mxu0
        %v628 = vmul.f32 %v620, 2.0
        %v629 = vmul.f32 %v625, 2.0
        %v630 = vsub.f32 %v628, %v539
        %v631 = vsub.f32 %v629, %v542
        %v633 = vlaneseq
        %v634 = vshrl.u32 %v633, 7
        %v635 = vsub.s32 0, %v634
        %v636 = vrot.slane %v530, %v635
        %v638 = vsub.f32 %v630, %v636
        %v639 = vsub.f32 %v631, %v636
        %v640 = vlaneseq
        %v641 = vand.u32 %v640, 127
        %vm642 = vcmask 64512
        %v643 = vsel %vm642, %v638, -inf
        %644 = vmax.xlane.f32.xlu0 %v643
        %v645 = vpop.xlane.xlu0 %644
        %v646 = vsel %vm642, %v639, -inf
        %647 = vmax.xlane.f32.xlu0 %v646
        %v648 = vpop.xlane.xlu0 %647
        %vm649 = vcmp.eq.f32.partialorder %v638, %v645
        %vm650 = vcmp.eq.f32.partialorder %v639, %v648
        %v651 = vsel %vm649, %v641, 8
        %v652 = vsel %vm650, %v641, 8
        %v653 = vsel %vm642, %v651, 2147483647
        %v654 = vand.u32 %v653, 65535
        %v655 = vshra.s32 %v653, 16
        %v656 = vcvt.s32.f32 %v654
        %v657 = vcvt.s32.f32 %v655
        %658 = vmin.xlane.f32.xlu0 %v657
        %v659 = vpop.xlane.xlu0 %658
        %vm660 = vcmp.eq.f32.partialorder %v657, %v659
        %v661 = vsel %vm660, %v656, inf
        %662 = vmin.xlane.f32.xlu0 %v661
        %v663 = vpop.xlane.xlu0 %662
        %v664 = vcvt.f32.s32 %v663
        %v665 = vcvt.f32.s32 %v659
        %v666 = vshll.u32 %v665, 16
        %v667 = vadd.s32 %v666, %v664
        %v668 = vsel %vm642, %v652, 2147483647
        %v669 = vand.u32 %v668, 65535
        %v670 = vshra.s32 %v668, 16
        %v671 = vcvt.s32.f32 %v669
        %v672 = vcvt.s32.f32 %v670
        %673 = vmin.xlane.f32.xlu0 %v672
        %v674 = vpop.xlane.xlu0 %673
        %vm675 = vcmp.eq.f32.partialorder %v672, %v674
        %v676 = vsel %vm675, %v671, inf
        %677 = vmin.xlane.f32.xlu0 %v676
        %v678 = vpop.xlane.xlu0 %677
        %v679 = vcvt.f32.s32 %v678
        %v680 = vcvt.f32.s32 %v674
        %v681 = vshll.u32 %v680, 16
        %v682 = vadd.s32 %v681, %v679
        %vm683 = vcmp.eq.s32.totalorder %v641, %v667
        %vm684 = vcmp.eq.s32.totalorder %v641, %v682
        %v685 = vmax.f32 %v645, 1e-10
        %v686 = vmax.f32 %v648, 1e-10
        %v687 = vmin.f32 %v685, 10000.0
        %v688 = vmin.f32 %v686, 10000.0
        %v689 = vrcp.pop %v687
        %v690 = vrcp.pop %v688
        %v691 = vsel %vm683, %v689, 0.0
        %v692 = vsel %vm684, %v690, 0.0
        %v694 = vsel %vm642, %v691, 0
        %v697 = vsel %vm642, %v692, 0
        %699 = vmatprep.subr.mxu0 0.0
        %700 = vmatpush1.msra.mxu0 %v533
        %701 = vmatprep.subr.mxu0 0.0
        %702 = vmatpush1.msra.mxu0 0.0
        %703 = vmatprep.subr.mxu0 0.0
        %704 = vmatpush1.msra.mxu0 0.0
        %705 = vmatprep.subr.mxu0 0.0
        %706 = vmatpush1.msra.mxu0 0.0
        %707 = vmatprep.subr.mxu0 0.0
        %708 = vmatpush1.msra.mxu0 0.0
        %709 = vmatprep.subr.mxu0 0.0
        %710 = vmatpush1.msra.mxu0 0.0
        %711 = vmatprep.subr.mxu0 0.0
        %712 = vmatpush1.msra.mxu0 0.0
        %713 = vmatprep.subr.mxu0 0.0
        %714 = vmatpush1.msra.mxu0 0.0
        %715 = vmatprep.subr.mxu0 0.0
        %716 = vmatpush1.msra.mxu0 0.0
        %717 = vmatprep.subr.mxu0 0.0
        %718 = vmatpush1.msra.mxu0 0.0
        %719 = vmatprep.subr.mxu0 0.0
        %720 = vmatpush1.msra.mxu0 0.0
        %721 = vmatprep.subr.mxu0 0.0
        %722 = vmatpush1.msra.mxu0 0.0
        %723 = vmatprep.subr.mxu0 0.0
        %724 = vmatpush1.msra.mxu0 0.0
        %725 = vmatprep.subr.mxu0 0.0
        %726 = vmatpush1.msra.mxu0 0.0
        %727 = vmatprep.subr.mxu0 0.0
        %728 = vmatpush1.msra.mxu0 0.0
        %729 = vmatprep.subr.mxu0 0.0
        %730 = vmatpush1.msra.mxu0 0.0
        %731 = vmatprep.subr.mxu0 0.0
        %732 = vmatpush1.msra.mxu0 0.0
        %733 = vmatprep.subr.mxu0 0.0
        %734 = vmatpush1.msra.mxu0 0.0
        %735 = vmatprep.subr.mxu0 0.0
        %736 = vmatpush1.msra.mxu0 0.0
        %737 = vmatprep.subr.mxu0 0.0
        %738 = vmatpush1.msra.mxu0 0.0
        %739 = vmatprep.subr.mxu0 0.0
        %740 = vmatpush1.msra.mxu0 0.0
        %741 = vmatprep.subr.mxu0 0.0
        %742 = vmatpush1.msra.mxu0 0.0
        %743 = vmatprep.subr.mxu0 0.0
        %744 = vmatpush1.msra.mxu0 0.0
        %745 = vmatprep.subr.mxu0 0.0
        %746 = vmatpush1.msra.mxu0 0.0
        %747 = vmatprep.subr.mxu0 0.0
        %748 = vmatpush1.msra.mxu0 0.0
        %749 = vmatprep.subr.mxu0 0.0
        %750 = vmatpush1.msra.mxu0 0.0
        %751 = vmatprep.subr.mxu0 0.0
        %752 = vmatpush1.msra.mxu0 0.0
        %753 = vmatprep.subr.mxu0 0.0
        %754 = vmatpush1.msra.mxu0 0.0
        %755 = vmatprep.subr.mxu0 0.0
        %756 = vmatpush1.msra.mxu0 0.0
        %757 = vmatprep.subr.mxu0 0.0
        %758 = vmatpush1.msra.mxu0 0.0
        %759 = vmatprep.subr.mxu0 0.0
        %760 = vmatpush1.msra.mxu0 0.0
        %761 = vmatprep.subr.mxu0 0.0
        %762 = vmatpush1.msra.mxu0 0.0
        %763 = vmatprep.mubr.f32.mxu0 0.0
        %764 = vmatmul.mubr.f32.gmra.mrb[0].mxu0 %v694
        %v765 = vpop.f32.mrb[0].mxu0
        %v766 = vadd.f32 0.0, %v765
        %v767 = vpop.f32.mrb[0].mxu0
        %768 = vmatprep.mubr.f32.mxu0 0.0
        %769 = vmatmul.mubr.f32.gmra.mrb[0].mxu0 %v697
        %v770 = vpop.f32.mrb[0].mxu0
        %v771 = vadd.f32 0.0, %v770
        %v772 = vpop.f32.mrb[0].mxu0
        %773 = vdwg.mxu0
        %v774 = vadd.f32 %v689, 0.0
        %v775 = vadd.f32 %v690, 0.0
        %v776 = vsel %vm683, -inf, %v638
        %v777 = vsel %vm684, -inf, %v639
        %v778 = vsel %vm642, %v776, -inf
        %779 = vmax.xlane.f32.xlu0 %v778
        %v780 = vpop.xlane.xlu0 %779
        %v781 = vsel %vm642, %v777, -inf
        %782 = vmax.xlane.f32.xlu0 %v781
        %v783 = vpop.xlane.xlu0 %782
        %vm784 = vcmp.eq.f32.partialorder %v776, %v780
        %vm785 = vcmp.eq.f32.partialorder %v777, %v783
        %v786 = vsel %vm784, %v641, 8
        %v787 = vsel %vm785, %v641, 8
        %v788 = vsel %vm642, %v786, 2147483647
        %v789 = vand.u32 %v788, 65535
        %v790 = vshra.s32 %v788, 16
        %v791 = vcvt.s32.f32 %v789
        %v792 = vcvt.s32.f32 %v790
        %793 = vmin.xlane.f32.xlu0 %v792
        %v794 = vpop.xlane.xlu0 %793
        %vm795 = vcmp.eq.f32.partialorder %v792, %v794
        %v796 = vsel %vm795, %v791, inf
        %797 = vmin.xlane.f32.xlu0 %v796
        %v798 = vpop.xlane.xlu0 %797
        %v799 = vcvt.f32.s32 %v798
        %v800 = vcvt.f32.s32 %v794
        %v801 = vshll.u32 %v800, 16
        %v802 = vadd.s32 %v801, %v799
        %v803 = vsel %vm642, %v787, 2147483647
        %v804 = vand.u32 %v803, 65535
        %v805 = vshra.s32 %v803, 16
        %v806 = vcvt.s32.f32 %v804
        %v807 = vcvt.s32.f32 %v805
        %808 = vmin.xlane.f32.xlu0 %v807
        %v809 = vpop.xlane.xlu0 %808
        %vm810 = vcmp.eq.f32.partialorder %v807, %v809
        %v811 = vsel %vm810, %v806, inf
        %812 = vmin.xlane.f32.xlu0 %v811
        %v813 = vpop.xlane.xlu0 %812
        %v814 = vcvt.f32.s32 %v813
        %v815 = vcvt.f32.s32 %v809
        %v816 = vshll.u32 %v815, 16
        %v817 = vadd.s32 %v816, %v814
        %vm818 = vcmp.eq.s32.totalorder %v641, %v802
        %vm819 = vcmp.eq.s32.totalorder %v641, %v817
        %v820 = vmax.f32 %v780, 1e-10
        %v821 = vmax.f32 %v783, 1e-10
        %v822 = vmin.f32 %v820, 10000.0
        %v823 = vmin.f32 %v821, 10000.0
        %v824 = vrcp.pop %v822
        %v825 = vrcp.pop %v823
        %v826 = vsel %vm818, %v824, 0.0
        %v827 = vsel %vm819, %v825, 0.0
        %v829 = vsel %vm642, %v826, 0
        %v832 = vsel %vm642, %v827, 0
        %834 = vmatprep.subr.mxu0 0.0
        %835 = vmatpush1.msra.mxu0 %v533
        %836 = vmatprep.subr.mxu0 0.0
        %837 = vmatpush1.msra.mxu0 0.0
        %838 = vmatprep.subr.mxu0 0.0
        %839 = vmatpush1.msra.mxu0 0.0
        %840 = vmatprep.subr.mxu0 0.0
        %841 = vmatpush1.msra.mxu0 0.0
        %842 = vmatprep.subr.mxu0 0.0
        %843 = vmatpush1.msra.mxu0 0.0
        %844 = vmatprep.subr.mxu0 0.0
        %845 = vmatpush1.msra.mxu0 0.0
        %846 = vmatprep.subr.mxu0 0.0
        %847 = vmatpush1.msra.mxu0 0.0
        %848 = vmatprep.subr.mxu0 0.0
        %849 = vmatpush1.msra.mxu0 0.0
        %850 = vmatprep.subr.mxu0 0.0
        %851 = vmatpush1.msra.mxu0 0.0
        %852 = vmatprep.subr.mxu0 0.0
        %853 = vmatpush1.msra.mxu0 0.0
        %854 = vmatprep.subr.mxu0 0.0
        %855 = vmatpush1.msra.mxu0 0.0
        %856 = vmatprep.subr.mxu0 0.0
        %857 = vmatpush1.msra.mxu0 0.0
        %858 = vmatprep.subr.mxu0 0.0
        %859 = vmatpush1.msra.mxu0 0.0
        %860 = vmatprep.subr.mxu0 0.0
        %861 = vmatpush1.msra.mxu0 0.0
        %862 = vmatprep.subr.mxu0 0.0
        %863 = vmatpush1.msra.mxu0 0.0
        %864 = vmatprep.subr.mxu0 0.0
        %865 = vmatpush1.msra.mxu0 0.0
        %866 = vmatprep.subr.mxu0 0.0
        %867 = vmatpush1.msra.mxu0 0.0
        %868 = vmatprep.subr.mxu0 0.0
        %869 = vmatpush1.msra.mxu0 0.0
        %870 = vmatprep.subr.mxu0 0.0
        %871 = vmatpush1.msra.mxu0 0.0
        %872 = vmatprep.subr.mxu0 0.0
        %873 = vmatpush1.msra.mxu0 0.0
        %874 = vmatprep.subr.mxu0 0.0
        %875 = vmatpush1.msra.mxu0 0.0
        %876 = vmatprep.subr.mxu0 0.0
        %877 = vmatpush1.msra.mxu0 0.0
        %878 = vmatprep.subr.mxu0 0.0
        %879 = vmatpush1.msra.mxu0 0.0
        %880 = vmatprep.subr.mxu0 0.0
        %881 = vmatpush1.msra.mxu0 0.0
        %882 = vmatprep.subr.mxu0 0.0
        %883 = vmatpush1.msra.mxu0 0.0
        %884 = vmatprep.subr.mxu0 0.0
        %885 = vmatpush1.msra.mxu0 0.0
        %886 = vmatprep.subr.mxu0 0.0
        %887 = vmatpush1.msra.mxu0 0.0
        %888 = vmatprep.subr.mxu0 0.0
        %889 = vmatpush1.msra.mxu0 0.0
        %890 = vmatprep.subr.mxu0 0.0
        %891 = vmatpush1.msra.mxu0 0.0
        %892 = vmatprep.subr.mxu0 0.0
        %893 = vmatpush1.msra.mxu0 0.0
        %894 = vmatprep.subr.mxu0 0.0
        %895 = vmatpush1.msra.mxu0 0.0
        %896 = vmatprep.subr.mxu0 0.0
        %897 = vmatpush1.msra.mxu0 0.0
        %898 = vmatprep.mubr.f32.mxu0 0.0
        %899 = vmatmul.mubr.f32.gmra.mrb[0].mxu0 %v829
        %v900 = vpop.f32.mrb[0].mxu0
        %v901 = vadd.f32 0.0, %v900
        %v902 = vpop.f32.mrb[0].mxu0
        %903 = vmatprep.mubr.f32.mxu0 0.0
        %904 = vmatmul.mubr.f32.gmra.mrb[0].mxu0 %v832
        %v905 = vpop.f32.mrb[0].mxu0
        %v906 = vadd.f32 0.0, %v905
        %v907 = vpop.f32.mrb[0].mxu0
        %908 = vdwg.mxu0
        %v909 = vmax.f32 %v766, %v901
        %v910 = vmax.f32 %v771, %v906
        %v911 = vadd.f32 %v774, %v824
        %v912 = vadd.f32 %v775, %v825
        %v913 = vsel %vm818, -inf, %v776
        %v914 = vsel %vm819, -inf, %v777
        %v915 = vsel %vm642, %v913, -inf
        %916 = vmax.xlane.f32.xlu0 %v915
        %v917 = vpop.xlane.xlu0 %916
        %v918 = vsel %vm642, %v914, -inf
        %919 = vmax.xlane.f32.xlu0 %v918
        %v920 = vpop.xlane.xlu0 %919
        %vm921 = vcmp.eq.f32.partialorder %v913, %v917
        %vm922 = vcmp.eq.f32.partialorder %v914, %v920
        %v923 = vsel %vm921, %v641, 8
        %v924 = vsel %vm922, %v641, 8
        %v925 = vsel %vm642, %v923, 2147483647
        %v926 = vand.u32 %v925, 65535
        %v927 = vshra.s32 %v925, 16
        %v928 = vcvt.s32.f32 %v926
        %v929 = vcvt.s32.f32 %v927
        %930 = vmin.xlane.f32.xlu0 %v929
        %v931 = vpop.xlane.xlu0 %930
        %vm932 = vcmp.eq.f32.partialorder %v929, %v931
        %v933 = vsel %vm932, %v928, inf
        %934 = vmin.xlane.f32.xlu0 %v933
        %v935 = vpop.xlane.xlu0 %934
        %v936 = vcvt.f32.s32 %v935
        %v937 = vcvt.f32.s32 %v931
        %v938 = vshll.u32 %v937, 16
        %v939 = vadd.s32 %v938, %v936
        %v940 = vsel %vm642, %v924, 2147483647
        %v941 = vand.u32 %v940, 65535
        %v942 = vshra.s32 %v940, 16
        %v943 = vcvt.s32.f32 %v941
        %v944 = vcvt.s32.f32 %v942
        %945 = vmin.xlane.f32.xlu0 %v944
        %v946 = vpop.xlane.xlu0 %945
        %vm947 = vcmp.eq.f32.partialorder %v944, %v946
        %v948 = vsel %vm947, %v943, inf
        %949 = vmin.xlane.f32.xlu0 %v948
        %v950 = vpop.xlane.xlu0 %949
        %v951 = vcvt.f32.s32 %v950
        %v952 = vcvt.f32.s32 %v946
        %v953 = vshll.u32 %v952, 16
        %v954 = vadd.s32 %v953, %v951
        %vm955 = vcmp.eq.s32.totalorder %v641, %v939
        %vm956 = vcmp.eq.s32.totalorder %v641, %v954
        %v957 = vmax.f32 %v917, 1e-10
        %v958 = vmax.f32 %v920, 1e-10
        %v959 = vmin.f32 %v957, 10000.0
        %v960 = vmin.f32 %v958, 10000.0
        %v961 = vrcp.pop %v959
        %v962 = vrcp.pop %v960
        %v963 = vsel %vm955, %v961, 0.0
        %v964 = vsel %vm956, %v962, 0.0
        %v966 = vsel %vm642, %v963, 0
        %v969 = vsel %vm642, %v964, 0
        %971 = vmatprep.subr.mxu0 0.0
        %972 = vmatpush1.msra.mxu0 %v533
        %973 = vmatprep.subr.mxu0 0.0
        %974 = vmatpush1.msra.mxu0 0.0
        %975 = vmatprep.subr.mxu0 0.0
        %976 = vmatpush1.msra.mxu0 0.0
        %977 = vmatprep.subr.mxu0 0.0
        %978 = vmatpush1.msra.mxu0 0.0
        %979 = vmatprep.subr.mxu0 0.0
        %980 = vmatpush1.msra.mxu0 0.0
        %981 = vmatprep.subr.mxu0 0.0
        %982 = vmatpush1.msra.mxu0 0.0
        %983 = vmatprep.subr.mxu0 0.0
        %984 = vmatpush1.msra.mxu0 0.0
        %985 = vmatprep.subr.mxu0 0.0
        %986 = vmatpush1.msra.mxu0 0.0
        %987 = vmatprep.subr.mxu0 0.0
        %988 = vmatpush1.msra.mxu0 0.0
        %989 = vmatprep.subr.mxu0 0.0
        %990 = vmatpush1.msra.mxu0 0.0
        %991 = vmatprep.subr.mxu0 0.0
        %992 = vmatpush1.msra.mxu0 0.0
        %993 = vmatprep.subr.mxu0 0.0
        %994 = vmatpush1.msra.mxu0 0.0
        %995 = vmatprep.subr.mxu0 0.0
        %996 = vmatpush1.msra.mxu0 0.0
        %997 = vmatprep.subr.mxu0 0.0
        %998 = vmatpush1.msra.mxu0 0.0
        %999 = vmatprep.subr.mxu0 0.0
        %1000 = vmatpush1.msra.mxu0 0.0
        %1001 = vmatprep.subr.mxu0 0.0
        %1002 = vmatpush1.msra.mxu0 0.0
        %1003 = vmatprep.subr.mxu0 0.0
        %1004 = vmatpush1.msra.mxu0 0.0
        %1005 = vmatprep.subr.mxu0 0.0
        %1006 = vmatpush1.msra.mxu0 0.0
        %1007 = vmatprep.subr.mxu0 0.0
        %1008 = vmatpush1.msra.mxu0 0.0
        %1009 = vmatprep.subr.mxu0 0.0
        %1010 = vmatpush1.msra.mxu0 0.0
        %1011 = vmatprep.subr.mxu0 0.0
        %1012 = vmatpush1.msra.mxu0 0.0
        %1013 = vmatprep.subr.mxu0 0.0
        %1014 = vmatpush1.msra.mxu0 0.0
        %1015 = vmatprep.subr.mxu0 0.0
        %1016 = vmatpush1.msra.mxu0 0.0
        %1017 = vmatprep.subr.mxu0 0.0
        %1018 = vmatpush1.msra.mxu0 0.0
        %1019 = vmatprep.subr.mxu0 0.0
        %1020 = vmatpush1.msra.mxu0 0.0
        %1021 = vmatprep.subr.mxu0 0.0
        %1022 = vmatpush1.msra.mxu0 0.0
        %1023 = vmatprep.subr.mxu0 0.0
        %1024 = vmatpush1.msra.mxu0 0.0
        %1025 = vmatprep.subr.mxu0 0.0
        %1026 = vmatpush1.msra.mxu0 0.0
        %1027 = vmatprep.subr.mxu0 0.0
        %1028 = vmatpush1.msra.mxu0 0.0
        %1029 = vmatprep.subr.mxu0 0.0
        %1030 = vmatpush1.msra.mxu0 0.0
        %1031 = vmatprep.subr.mxu0 0.0
        %1032 = vmatpush1.msra.mxu0 0.0
        %1033 = vmatprep.subr.mxu0 0.0
        %1034 = vmatpush1.msra.mxu0 0.0
        %1035 = vmatprep.mubr.f32.mxu0 0.0
        %1036 = vmatmul.mubr.f32.gmra.mrb[0].mxu0 %v966
        %v1037 = vpop.f32.mrb[0].mxu0
        %v1038 = vadd.f32 0.0, %v1037
        %v1039 = vpop.f32.mrb[0].mxu0
        %1040 = vmatprep.mubr.f32.mxu0 0.0
        %1041 = vmatmul.mubr.f32.gmra.mrb[0].mxu0 %v969
        %v1042 = vpop.f32.mrb[0].mxu0
        %v1043 = vadd.f32 0.0, %v1042
        %v1044 = vpop.f32.mrb[0].mxu0
        %1045 = vdwg.mxu0
        %v1046 = vmax.f32 %v909, %v1038
        %v1047 = vmax.f32 %v910, %v1043
        %v1048 = vadd.f32 %v911, %v961
        %v1049 = vadd.f32 %v912, %v962
        %v1050 = vrcp.pop %v1048
        %v1051 = vrcp.pop %v1049
        %v1052 = vmul.f32 %v1046, %v1050
        %v1053 = vmul.f32 %v1047, %v1051
        %v1054 = vld [vmem:[%s5] sm:$0xff]
        %v1055 = vld [vmem:[%s6] sm:$0x3f]
        %vm1056 = vcmask 48128
        %v1058 = vsel %vm1056, %v531, 0
        %v1061 = vsel %vm1056, %v532, 0
        %vm1063 = vcmask 1045504
        %v1065 = vsel %vm1063, %v1055, 0
        %1067 = vmatprep.subr.mxu0 0.0
        %1068 = vmatpush1.msra.mxu0 %v1065
        %1069 = vmatprep.subr.mxu0 0.0
        %1070 = vmatpush1.msra.mxu0 0.0
        %1071 = vmatprep.subr.mxu0 0.0
        %1072 = vmatpush1.msra.mxu0 0.0
        %1073 = vmatprep.subr.mxu0 0.0
        %1074 = vmatpush1.msra.mxu0 0.0
        %1075 = vmatprep.subr.mxu0 0.0
        %1076 = vmatpush1.msra.mxu0 0.0
        %1077 = vmatprep.subr.mxu0 0.0
        %1078 = vmatpush1.msra.mxu0 0.0
        %1079 = vmatprep.subr.mxu0 0.0
        %1080 = vmatpush1.msra.mxu0 0.0
        %1081 = vmatprep.subr.mxu0 0.0
        %1082 = vmatpush1.msra.mxu0 0.0
        %1083 = vmatprep.subr.mxu0 0.0
        %1084 = vmatpush1.msra.mxu0 0.0
        %1085 = vmatprep.subr.mxu0 0.0
        %1086 = vmatpush1.msra.mxu0 0.0
        %1087 = vmatprep.subr.mxu0 0.0
        %1088 = vmatpush1.msra.mxu0 0.0
        %1089 = vmatprep.subr.mxu0 0.0
        %1090 = vmatpush1.msra.mxu0 0.0
        %1091 = vmatprep.subr.mxu0 0.0
        %1092 = vmatpush1.msra.mxu0 0.0
        %1093 = vmatprep.subr.mxu0 0.0
        %1094 = vmatpush1.msra.mxu0 0.0
        %1095 = vmatprep.subr.mxu0 0.0
        %1096 = vmatpush1.msra.mxu0 0.0
        %1097 = vmatprep.subr.mxu0 0.0
        %1098 = vmatpush1.msra.mxu0 0.0
        %1099 = vmatprep.subr.mxu0 0.0
        %1100 = vmatpush1.msra.mxu0 0.0
        %1101 = vmatprep.subr.mxu0 0.0
        %1102 = vmatpush1.msra.mxu0 0.0
        %1103 = vmatprep.subr.mxu0 0.0
        %1104 = vmatpush1.msra.mxu0 0.0
        %1105 = vmatprep.subr.mxu0 0.0
        %1106 = vmatpush1.msra.mxu0 0.0
        %1107 = vmatprep.subr.mxu0 0.0
        %1108 = vmatpush1.msra.mxu0 0.0
        %1109 = vmatprep.subr.mxu0 0.0
        %1110 = vmatpush1.msra.mxu0 0.0
        %1111 = vmatprep.subr.mxu0 0.0
        %1112 = vmatpush1.msra.mxu0 0.0
        %1113 = vmatprep.subr.mxu0 0.0
        %1114 = vmatpush1.msra.mxu0 0.0
        %1115 = vmatprep.subr.mxu0 0.0
        %1116 = vmatpush1.msra.mxu0 0.0
        %1117 = vmatprep.subr.mxu0 0.0
        %1118 = vmatpush1.msra.mxu0 0.0
        %1119 = vmatprep.subr.mxu0 0.0
        %1120 = vmatpush1.msra.mxu0 0.0
        %1121 = vmatprep.subr.mxu0 0.0
        %1122 = vmatpush1.msra.mxu0 0.0
        %1123 = vmatprep.subr.mxu0 0.0
        %1124 = vmatpush1.msra.mxu0 0.0
        %1125 = vmatprep.subr.mxu0 0.0
        %1126 = vmatpush1.msra.mxu0 0.0
        %1127 = vmatprep.subr.mxu0 0.0
        %1128 = vmatpush1.msra.mxu0 0.0
        %1129 = vmatprep.subr.mxu0 0.0
        %1130 = vmatpush1.msra.mxu0 0.0
        %1131 = vmatprep.mubr.f32.mxu0 0.0
        %1132 = vmatmul.mubr.f32.gmra.mrb[0].mxu0 %v1058
        %v1133 = vpop.f32.mrb[0].mxu0
        %v1134 = vadd.f32 0.0, %v1133
        %v1135 = vpop.f32.mrb[0].mxu0
        %1136 = vmatprep.mubr.f32.mxu0 0.0
        %1137 = vmatmul.mubr.f32.gmra.mrb[0].mxu0 %v1061
        %v1138 = vpop.f32.mrb[0].mxu0
        %v1139 = vadd.f32 0.0, %v1138
        %v1140 = vpop.f32.mrb[0].mxu0
        %1141 = vdwg.mxu0
        %v1143 = vsel %vm642, %v1052, 0
        %v1146 = vsel %vm642, %v1053, 0
        %1148 = vmatprep.subr.mxu0 0.0
        %1149 = vmatpush1.msra.mxu0 %v1054
        %1150 = vmatprep.subr.mxu0 0.0
        %1151 = vmatpush1.msra.mxu0 0.0
        %1152 = vmatprep.subr.mxu0 0.0
        %1153 = vmatpush1.msra.mxu0 0.0
        %1154 = vmatprep.subr.mxu0 0.0
        %1155 = vmatpush1.msra.mxu0 0.0
        %1156 = vmatprep.subr.mxu0 0.0
        %1157 = vmatpush1.msra.mxu0 0.0
        %1158 = vmatprep.subr.mxu0 0.0
        %1159 = vmatpush1.msra.mxu0 0.0
        %1160 = vmatprep.subr.mxu0 0.0
        %1161 = vmatpush1.msra.mxu0 0.0
        %1162 = vmatprep.subr.mxu0 0.0
        %1163 = vmatpush1.msra.mxu0 0.0
        %1164 = vmatprep.subr.mxu0 0.0
        %1165 = vmatpush1.msra.mxu0 0.0
        %1166 = vmatprep.subr.mxu0 0.0
        %1167 = vmatpush1.msra.mxu0 0.0
        %1168 = vmatprep.subr.mxu0 0.0
        %1169 = vmatpush1.msra.mxu0 0.0
        %1170 = vmatprep.subr.mxu0 0.0
        %1171 = vmatpush1.msra.mxu0 0.0
        %1172 = vmatprep.subr.mxu0 0.0
        %1173 = vmatpush1.msra.mxu0 0.0
        %1174 = vmatprep.subr.mxu0 0.0
        %1175 = vmatpush1.msra.mxu0 0.0
        %1176 = vmatprep.subr.mxu0 0.0
        %1177 = vmatpush1.msra.mxu0 0.0
        %1178 = vmatprep.subr.mxu0 0.0
        %1179 = vmatpush1.msra.mxu0 0.0
        %1180 = vmatprep.subr.mxu0 0.0
        %1181 = vmatpush1.msra.mxu0 0.0
        %1182 = vmatprep.subr.mxu0 0.0
        %1183 = vmatpush1.msra.mxu0 0.0
        %1184 = vmatprep.subr.mxu0 0.0
        %1185 = vmatpush1.msra.mxu0 0.0
        %1186 = vmatprep.subr.mxu0 0.0
        %1187 = vmatpush1.msra.mxu0 0.0
        %1188 = vmatprep.subr.mxu0 0.0
        %1189 = vmatpush1.msra.mxu0 0.0
        %1190 = vmatprep.subr.mxu0 0.0
        %1191 = vmatpush1.msra.mxu0 0.0
        %1192 = vmatprep.subr.mxu0 0.0
        %1193 = vmatpush1.msra.mxu0 0.0
        %1194 = vmatprep.subr.mxu0 0.0
        %1195 = vmatpush1.msra.mxu0 0.0
        %1196 = vmatprep.subr.mxu0 0.0
        %1197 = vmatpush1.msra.mxu0 0.0
        %1198 = vmatprep.subr.mxu0 0.0
        %1199 = vmatpush1.msra.mxu0 0.0
        %1200 = vmatprep.subr.mxu0 0.0
        %1201 = vmatpush1.msra.mxu0 0.0
        %1202 = vmatprep.subr.mxu0 0.0
        %1203 = vmatpush1.msra.mxu0 0.0
        %1204 = vmatprep.subr.mxu0 0.0
        %1205 = vmatpush1.msra.mxu0 0.0
        %1206 = vmatprep.subr.mxu0 0.0
        %1207 = vmatpush1.msra.mxu0 0.0
        %1208 = vmatprep.subr.mxu0 0.0
        %1209 = vmatpush1.msra.mxu0 0.0
        %1210 = vmatprep.subr.mxu0 0.0
        %1211 = vmatpush1.msra.mxu0 0.0
        %1212 = vmatprep.mubr.f32.mxu0 0.0
        %1213 = vmatmul.mubr.f32.gmra.mrb[0].mxu0 %v1143
        %v1214 = vpop.f32.mrb[0].mxu0
        %v1215 = vadd.f32 %v1134, %v1214
        %v1216 = vpop.f32.mrb[0].mxu0
        %1217 = vmatprep.mubr.f32.mxu0 0.0
        %1218 = vmatmul.mubr.f32.gmra.mrb[0].mxu0 %v1146
        %v1219 = vpop.f32.mrb[0].mxu0
        %v1220 = vadd.f32 %v1139, %v1219
        %v1221 = vpop.f32.mrb[0].mxu0
        %1222 = vdwg.mxu0
        %v1223 = vld [vmem:[%s7] sm:$0x1]
        %v1225 = vlaneseq
        %v1226 = vshrl.u32 %v1225, 7
        %v1227 = vsub.s32 0, %v1226
        %v1228 = vrot.slane %v1223, %v1227
        %v1230 = vadd.f32 %v1215, %v1228
        %v1231 = vadd.f32 %v1220, %v1228
        %v1232 = vmax.f32 %v1230, 0.0
        %v1233 = vmax.f32 %v1231, 0.0
        %v1234 = vld [vmem:[%s8] sm:$0xff]
        %v1235 = vld [vmem:[%s8 + $0x8] sm:$0xff]
        %v1236 = vld [vmem:[%s8 + $0x10] sm:$0xff]
        %v1237 = vld [vmem:[%s8 + $0x18] sm:$0xff]
        %v1238 = vld [vmem:[%s9] sm:$0x1]
        %v1240 = vlaneseq
        %v1241 = vshrl.u32 %v1240, 7
        %v1242 = vsub.s32 0, %v1241
        %v1243 = vrot.slane %v1238, %v1242
        %vm1245 = vcmask 261120
        %v1247 = vsel %vm1245, %v1232, 0
        %v1250 = vsel %vm1245, %v1233, 0
        %1252 = vmatprep.subr.mxu0 0.0
        %1253 = vmatpush1.msra.mxu0 %v1234
        %1254 = vmatprep.subr.mxu0 0.0
        %1255 = vmatpush1.msra.mxu0 %v1235
        %1256 = vmatprep.subr.mxu0 0.0
        %1257 = vmatpush1.msra.mxu0 %v1236
        %1258 = vmatprep.subr.mxu0 0.0
        %1259 = vmatpush1.msra.mxu0 %v1237
        %1260 = vmatprep.subr.mxu0 0.0
        %1261 = vmatpush1.msra.mxu0 0.0
        %1262 = vmatprep.subr.mxu0 0.0
        %1263 = vmatpush1.msra.mxu0 0.0
        %1264 = vmatprep.subr.mxu0 0.0
        %1265 = vmatpush1.msra.mxu0 0.0
        %1266 = vmatprep.subr.mxu0 0.0
        %1267 = vmatpush1.msra.mxu0 0.0
        %1268 = vmatprep.subr.mxu0 0.0
        %1269 = vmatpush1.msra.mxu0 0.0
        %1270 = vmatprep.subr.mxu0 0.0
        %1271 = vmatpush1.msra.mxu0 0.0
        %1272 = vmatprep.subr.mxu0 0.0
        %1273 = vmatpush1.msra.mxu0 0.0
        %1274 = vmatprep.subr.mxu0 0.0
        %1275 = vmatpush1.msra.mxu0 0.0
        %1276 = vmatprep.subr.mxu0 0.0
        %1277 = vmatpush1.msra.mxu0 0.0
        %1278 = vmatprep.subr.mxu0 0.0
        %1279 = vmatpush1.msra.mxu0 0.0
        %1280 = vmatprep.subr.mxu0 0.0
        %1281 = vmatpush1.msra.mxu0 0.0
        %1282 = vmatprep.subr.mxu0 0.0
        %1283 = vmatpush1.msra.mxu0 0.0
        %1284 = vmatprep.subr.mxu0 0.0
        %1285 = vmatpush1.msra.mxu0 0.0
        %1286 = vmatprep.subr.mxu0 0.0
        %1287 = vmatpush1.msra.mxu0 0.0
        %1288 = vmatprep.subr.mxu0 0.0
        %1289 = vmatpush1.msra.mxu0 0.0
        %1290 = vmatprep.subr.mxu0 0.0
        %1291 = vmatpush1.msra.mxu0 0.0
        %1292 = vmatprep.subr.mxu0 0.0
        %1293 = vmatpush1.msra.mxu0 0.0
        %1294 = vmatprep.subr.mxu0 0.0
        %1295 = vmatpush1.msra.mxu0 0.0
        %1296 = vmatprep.subr.mxu0 0.0
        %1297 = vmatpush1.msra.mxu0 0.0
        %1298 = vmatprep.subr.mxu0 0.0
        %1299 = vmatpush1.msra.mxu0 0.0
        %1300 = vmatprep.subr.mxu0 0.0
        %1301 = vmatpush1.msra.mxu0 0.0
        %1302 = vmatprep.subr.mxu0 0.0
        %1303 = vmatpush1.msra.mxu0 0.0
        %1304 = vmatprep.subr.mxu0 0.0
        %1305 = vmatpush1.msra.mxu0 0.0
        %1306 = vmatprep.subr.mxu0 0.0
        %1307 = vmatpush1.msra.mxu0 0.0
        %1308 = vmatprep.subr.mxu0 0.0
        %1309 = vmatpush1.msra.mxu0 0.0
        %1310 = vmatprep.subr.mxu0 0.0
        %1311 = vmatpush1.msra.mxu0 0.0
        %1312 = vmatprep.subr.mxu0 0.0
        %1313 = vmatpush1.msra.mxu0 0.0
        %1314 = vmatprep.subr.mxu0 0.0
        %1315 = vmatpush1.msra.mxu0 0.0
        %1316 = vmatprep.mubr.f32.mxu0 0.0
        %1317 = vmatmul.mubr.f32.gmra.mrb[0].mxu0 %v1247
        %v1318 = vpop.f32.mrb[0].mxu0
        %v1319 = vadd.f32 %v1243, %v1318
        %v1320 = vpop.f32.mrb[0].mxu0
        %1321 = vmatprep.mubr.f32.mxu0 0.0
        %1322 = vmatmul.mubr.f32.gmra.mrb[0].mxu0 %v1250
        %v1323 = vpop.f32.mrb[0].mxu0
        %v1324 = vadd.f32 %v1243, %v1323
        %v1325 = vpop.f32.mrb[0].mxu0
        %1326 = vdwg.mxu0
        %v1327 = vmax.f32 %v1319, 0.0
        %v1328 = vmax.f32 %v1324, 0.0
        %v1329 = vld [vmem:[%s10] sm:$0xff]
        %v1330 = vld [vmem:[%s10 + $0x8] sm:$0xff]
        %v1331 = vld [vmem:[%s10 + $0x10] sm:$0xff]
        %v1332 = vld [vmem:[%s10 + $0x18] sm:$0xff]
        %v1333 = vld [vmem:[%s11] sm:$0x1]
        %v1335 = vlaneseq
        %v1336 = vshrl.u32 %v1335, 7
        %v1337 = vsub.s32 0, %v1336
        %v1338 = vrot.slane %v1333, %v1337
        %v1341 = vsel %vm1245, %v1327, 0
        %v1344 = vsel %vm1245, %v1328, 0
        %1346 = vmatprep.subr.mxu0 0.0
        %1347 = vmatpush1.msra.mxu0 %v1329
        %1348 = vmatprep.subr.mxu0 0.0
        %1349 = vmatpush1.msra.mxu0 %v1330
        %1350 = vmatprep.subr.mxu0 0.0
        %1351 = vmatpush1.msra.mxu0 %v1331
        %1352 = vmatprep.subr.mxu0 0.0
        %1353 = vmatpush1.msra.mxu0 %v1332
        %1354 = vmatprep.subr.mxu0 0.0
        %1355 = vmatpush1.msra.mxu0 0.0
        %1356 = vmatprep.subr.mxu0 0.0
        %1357 = vmatpush1.msra.mxu0 0.0
        %1358 = vmatprep.subr.mxu0 0.0
        %1359 = vmatpush1.msra.mxu0 0.0
        %1360 = vmatprep.subr.mxu0 0.0
        %1361 = vmatpush1.msra.mxu0 0.0
        %1362 = vmatprep.subr.mxu0 0.0
        %1363 = vmatpush1.msra.mxu0 0.0
        %1364 = vmatprep.subr.mxu0 0.0
        %1365 = vmatpush1.msra.mxu0 0.0
        %1366 = vmatprep.subr.mxu0 0.0
        %1367 = vmatpush1.msra.mxu0 0.0
        %1368 = vmatprep.subr.mxu0 0.0
        %1369 = vmatpush1.msra.mxu0 0.0
        %1370 = vmatprep.subr.mxu0 0.0
        %1371 = vmatpush1.msra.mxu0 0.0
        %1372 = vmatprep.subr.mxu0 0.0
        %1373 = vmatpush1.msra.mxu0 0.0
        %1374 = vmatprep.subr.mxu0 0.0
        %1375 = vmatpush1.msra.mxu0 0.0
        %1376 = vmatprep.subr.mxu0 0.0
        %1377 = vmatpush1.msra.mxu0 0.0
        %1378 = vmatprep.subr.mxu0 0.0
        %1379 = vmatpush1.msra.mxu0 0.0
        %1380 = vmatprep.subr.mxu0 0.0
        %1381 = vmatpush1.msra.mxu0 0.0
        %1382 = vmatprep.subr.mxu0 0.0
        %1383 = vmatpush1.msra.mxu0 0.0
        %1384 = vmatprep.subr.mxu0 0.0
        %1385 = vmatpush1.msra.mxu0 0.0
        %1386 = vmatprep.subr.mxu0 0.0
        %1387 = vmatpush1.msra.mxu0 0.0
        %1388 = vmatprep.subr.mxu0 0.0
        %1389 = vmatpush1.msra.mxu0 0.0
        %1390 = vmatprep.subr.mxu0 0.0
        %1391 = vmatpush1.msra.mxu0 0.0
        %1392 = vmatprep.subr.mxu0 0.0
        %1393 = vmatpush1.msra.mxu0 0.0
        %1394 = vmatprep.subr.mxu0 0.0
        %1395 = vmatpush1.msra.mxu0 0.0
        %1396 = vmatprep.subr.mxu0 0.0
        %1397 = vmatpush1.msra.mxu0 0.0
        %1398 = vmatprep.subr.mxu0 0.0
        %1399 = vmatpush1.msra.mxu0 0.0
        %1400 = vmatprep.subr.mxu0 0.0
        %1401 = vmatpush1.msra.mxu0 0.0
        %1402 = vmatprep.subr.mxu0 0.0
        %1403 = vmatpush1.msra.mxu0 0.0
        %1404 = vmatprep.subr.mxu0 0.0
        %1405 = vmatpush1.msra.mxu0 0.0
        %1406 = vmatprep.subr.mxu0 0.0
        %1407 = vmatpush1.msra.mxu0 0.0
        %1408 = vmatprep.subr.mxu0 0.0
        %1409 = vmatpush1.msra.mxu0 0.0
        %1410 = vmatprep.mubr.f32.mxu0 0.0
        %1411 = vmatmul.mubr.f32.gmra.mrb[0].mxu0 %v1341
        %v1412 = vpop.f32.mrb[0].mxu0
        %v1413 = vadd.f32 %v1338, %v1412
        %v1414 = vpop.f32.mrb[0].mxu0
        %1415 = vmatprep.mubr.f32.mxu0 0.0
        %1416 = vmatmul.mubr.f32.gmra.mrb[0].mxu0 %v1344
        %v1417 = vpop.f32.mrb[0].mxu0
        %v1418 = vadd.f32 %v1338, %v1417
        %v1419 = vpop.f32.mrb[0].mxu0
        %1420 = vdwg.mxu0
        %v1421 = vmax.f32 %v1413, 0.0
        %v1422 = vmax.f32 %v1418, 0.0
        %1423 = vst [vmem:[%s494] sm:$0xff] %v1421
        %1424 = vst [vmem:[%s494 + $0x8] sm:$0xff] %v1422
        %s1425 = sand.u32 %s329, 1
        %s1426 = scalar_lea.sflag [#allocation3], %s1425
        %s1427 = sand.u32 %s329, 1
        %s1428 = smul.addr %s1427, 16
        %s1429 = scalar_lea.vmem [#allocation2], %s1428
        // Predicated region
        $region69: #{tpu_custom_call.1} parent=67 // pred_check
          %p1430 = pneg %p339
        $region70: #{tpu_custom_call.1} parent=67 // pred_check_branch
          %1432 = sbr.rel (%p1430) target = $region72
        $region71: #{tpu_custom_call.1} parent=67 // pred_region
          %s1433 = smul.u32 2, %s31
          %s1435 = ssub.s32 256, 256
          %1436 = vsyncadd %s1426, %s1435
          %s1437 = smul.addr %s30, 6
          %s1438 = sadd.s32 %s1433, %s1437
          %s1439 = smul.addr %s1438, 128
          %s1440 = scalar_lea.hbm %s12, %s1439
          %s1441 = sshll.u32 %s1429, 4
          %s1442 = int_to_ptr.vmem [resolvable:$true] %s1441
          %1447 = dma.vmem_to_hbm [thread:$0]  %s1442, 256, %s1440, %s1426, 128, 128, 8
        $region72: #{tpu_custom_call.1} parent=67 // pred_fallthru
          _
      $region68: #{tpu_custom_call.1} parent=5 // pred_fallthru
        _
      %p1448 = scmp.le.s32.totalorder 2, %s21
      // Predicated region
      $region73: #{tpu_custom_call.1} parent=5 // pred_check
        %p1449 = pneg %p1448
      $region74: #{tpu_custom_call.1} parent=5 // pred_check_branch
        %1451 = sbr.rel (%p1449) target = $region76
      $region75: #{tpu_custom_call.1} parent=5 // pred_region
        %s1452 = ssub.s32 %s21, 2
        // Predicated region
        $region77: #{tpu_custom_call.1} parent=75 // pred_check
          %p1453 = pneg %p345
        $region78: #{tpu_custom_call.1} parent=75 // pred_check_branch
          %1455 = sbr.rel (%p1453) target = $region80
        $region79: #{tpu_custom_call.1} parent=75 // pred_region
          %s1456 = sand.u32 %s330, 1
          %s1457 = scalar_lea.sflag [#allocation3], %s1456
          %s1458 = sand.u32 %s330, 1
          %s1459 = smul.addr %s1458, 16
          %s1460 = scalar_lea.vmem [#allocation2], %s1459
          %1461 = dma.done %s1457, 256
        $region80: #{tpu_custom_call.1} parent=75 // pred_fallthru
          _
      $region76: #{tpu_custom_call.1} parent=5 // pred_fallthru
        _
    $region6: #{tpu_custom_call.1} parent=1 // loop_footer
      %s25 = sadd.s32 1, %s21
    $region7: #{tpu_custom_call.1} parent=1 // loop_footer_branch
      %20 = sbr.rel target = $region3
    $region8: #{tpu_custom_call.1} parent=1 // loop_exit
      _
    %1462 = vsyncpa [#allocation3], 1
    %s1463 = scalar_lea.sflag [#allocation3], 1
    %1464 = vsyncpa %s1463, 1

</llo_original>
